<compile_context>
chip_gen: v7x
topology: tpu7x:2x2x1
jax: 0.10.0
libtpu: 0.0.40
codegen_flags: <defaults>
</compile_context>

<pallas_src>
import jax
import jax.numpy as jnp
from jax import lax
from jax.experimental import pallas as pl
from jax.experimental.pallas import tpu as pltpu


def _round_up(x: int, m: int) -> int:
    return ((x + m - 1) // m) * m


def prepare_dense_network_params(emb_table, w1, b1, w2, b2, *,
                                 compute_dtype=jnp.float32):
    """One-time weight prep, hoisted out of the per-call forward path.

    Folds the frozen embedding into Linear1 (sum_s E[x[b,s]] @ W1 == sum_s (E@W1)[x[b,s]])
    and zero-pads everything lane-dense.  w1: [D, 16], w2: [16, L] (already transposed vs.
    PyTorch's [out, in] layout).
    """
    V, _D = emb_table.shape
    H = w1.shape[1]
    L = w2.shape[1]
    VP = _round_up(V, 8)      # gather indexes the sublane dim -> pad rows to 8 only
    HP = _round_up(H, 128)    # lane-dense hidden
    LP = _round_up(L, 128)    # lane-dense output (unmasked vst)

    folded = emb_table.astype(jnp.float32) @ w1.astype(jnp.float32)          # [V, H]
    folded_p = (jnp.zeros((VP, HP), jnp.float32).at[:V, :H].set(folded)
                .astype(compute_dtype))
    b1_p = jnp.zeros((1, HP), jnp.float32).at[:, :H].set(b1.reshape(1, -1))
    w2_p = jnp.zeros((HP, LP), jnp.float32).at[:H, :L].set(w2.astype(jnp.float32))
    b2_p = jnp.zeros((1, LP), jnp.float32).at[:, :L].set(b2.reshape(1, -1))
    return {"folded": folded_p, "b1": b1_p, "w2": w2_p, "b2": b2_p,
            "num_embeddings": V, "num_labels": L}


def dense_network_forward_prepared(x_ids, params, *, block_b=256):
    """Forward pass using pre-folded/padded params.  x_ids: [B, S] int32 -> [B, L] f32."""
    B, S = x_ids.shape
    folded_p, b1_p, w2_p, b2_p = (params["folded"], params["b1"],
                                  params["w2"], params["b2"])
    V = params["num_embeddings"]
    L = params["num_labels"]
    VP, HP = folded_p.shape
    LP = w2_p.shape[1]

    # ---- batch tiling -------------------------------------------------------
    TB = min(_round_up(block_b, 8), _round_up(B, 8))
    if _round_up(B, TB) // TB < 2 and B > 8:
        # v7x megacore: make sure there are >= 2 grid steps so both TCs get work.
        TB = _round_up((B + 1) // 2, 8)
    BP = _round_up(B, TB)
    grid = (BP // TB,)

    # Token ids live in SMEM via scalar prefetch (padded rows are token 0 -> discarded).
    # NOTE: for very large B*S the id table should be chunked; fine for moderate sizes.
    ids_p = jnp.zeros((BP, S), jnp.int32).at[:B, :].set(x_ids.astype(jnp.int32))

    # ---- kernel -------------------------------------------------------------
    def kernel(ids_ref, folded_ref, b1_ref, w2_ref, b2_ref, o_ref, h_ref):
        base = pl.program_id(0) * TB

        # In-kernel sequence reduction: for each example in the batch tile, gather its S
        # rows of the VMEM-resident folded table (ids read as scalars from SMEM) and
        # accumulate in f32.  Rows are processed in sublane groups of 8 so the h-scratch
        # store stays tile-aligned.
        @pl.loop(0, TB // 8)
        def _(g):
            r0 = pl.multiple_of(g * 8, 8)
            rows = []
            for j in range(8):                      # static unroll over one sublane group
                def add_token(s, acc, _j=j):
                    tok = ids_ref[base + r0 + _j, s]
                    # PyTorch nn.Embedding raises on out-of-range ids; clamp instead so a
                    # bad id can never read outside the table in VMEM.
                    tok = jnp.minimum(jnp.maximum(tok, 0), V - 1)
                    return acc + folded_ref[pl.ds(tok, 1), :].astype(jnp.float32)
                rows.append(lax.fori_loop(0, S, add_token,
                                          jnp.zeros((1, HP), jnp.float32)))
            h_ref[pl.ds(r0, 8), :] = jnp.concatenate(rows, axis=0)

        # Epilogue: bias + ReLU in f32 (v5e-safe: no bf16 VPU there), then the tiny second
        # matmul on the MXU with f32 accumulation.
        h = jnp.maximum(h_ref[...] + b1_ref[...], 0.0)
        o_ref[...] = (jnp.dot(h, w2_ref[...], preferred_element_type=jnp.float32)
                      + b2_ref[...]).astype(o_ref.dtype)

    # ---- VMEM budget (worst case: double-buffered constants) + headroom ----
    # v5e/v6e have 128 MiB physical VMEM; v7x has 64 MiB.  If `need` approaches 64 MiB,
    # use compute_dtype=bfloat16 for the folded table and/or a smaller block_b.
    itemsize = folded_p.dtype.itemsize
    need = (2 * folded_p.size * itemsize
            + 2 * 4 * (b1_p.size + w2_p.size + b2_p.size)
            + 2 * 4 * TB * LP            # double-buffered output tile
            + 4 * TB * HP)               # h scratch
    vmem_limit = int(min(max(32 * 1024 * 1024, 1.5 * need), 100 * 1024 * 1024))

    def build(single_buffer_consts):
        def const_spec(shape):
            if single_buffer_consts:
                # Grid-invariant operands: single-buffer them; double-buffering a block
                # whose index_map is constant only wastes VMEM.
                return pl.BlockSpec(shape, lambda i, ids: (0, 0),
                                    pipeline_mode=pl.Buffered(1))
            return pl.BlockSpec(shape, lambda i, ids: (0, 0))

        return pl.pallas_call(
            kernel,
            out_shape=jax.ShapeDtypeStruct((BP, LP), jnp.float32),
            grid_spec=pltpu.PrefetchScalarGridSpec(
                num_scalar_prefetch=1,              # token ids -> SMEM
                grid=grid,
                in_specs=[
                    const_spec((VP, HP)),           # folded table (VMEM resident)
                    const_spec((1, HP)),            # b1
                    const_spec((HP, LP)),           # w2 (padded)
                    const_spec((1, LP)),            # b2
                ],
                out_specs=pl.BlockSpec((TB, LP), lambda i, ids: (i, 0)),
                scratch_shapes=[pltpu.VMEM((TB, HP), jnp.float32)],
            ),
            compiler_params=pltpu.CompilerParams(
                dimension_semantics=("parallel",),  # batch tiles shard across v7x's 2 TCs
                vmem_limit_bytes=vmem_limit,
            ),
        )

    try:
        out = build(True)(ids_p, folded_p, b1_p, w2_p, b2_p)
    except Exception:
        # pl.Buffered(1) not accepted by this JAX version -> fall back to default buffering.
        out = build(False)(ids_p, folded_p, b1_p, w2_p, b2_p)

    return out[:B, :L]


def dense_network_forward(x_ids, emb_table, w1, b1, w2, b2, *,
                          compute_dtype=jnp.float32, block_b=256):
    """Convenience one-shot API (prep + forward).  Prefer the two-step API to amortize prep."""
    params = prepare_dense_network_params(emb_table, w1, b1, w2, b2,
                                          compute_dtype=compute_dtype)
    return dense_network_forward_prepared(x_ids, params, block_b=block_b)


def reference_forward(x_ids, emb_table, w1, b1, w2, b2):
    """Pure-JAX reference matching the PyTorch module (gather -> sum -> MLP)."""
    embeds = jnp.take(emb_table, x_ids, axis=0)        # [B, S, D]
    sent = jnp.sum(embeds, axis=1)                     # [B, D]
    h = jnp.maximum(sent @ w1 + b1, 0.0)               # [B, 16]
    return h @ w2 + b2                                 # [B, L]


if __name__ == "__main__":
    key = jax.random.PRNGKey(0)
    k_emb, k_ids, k_ids2, k_w1, k_b1, k_w2, k_b2 = jax.random.split(key, 7)

    # Small shapes consistent with the module.
    B, S = 2, 8            # batch, sequence length
    V, D = 32, 32          # vocab size, embedding_dim
    num_labels = 4

    emb_table = jax.random.normal(k_emb, (V, D), dtype=jnp.float32)
    x_ids = jax.random.randint(k_ids, (B, S), 0, V, dtype=jnp.int32)

    # PyTorch Linear: y = x @ W.T + b; we store W.T directly.
    w1 = jax.random.normal(k_w1, (D, 16), dtype=jnp.float32) * 0.1
    b1 = jax.random.normal(k_b1, (16,), dtype=jnp.float32) * 0.1
    w2 = jax.random.normal(k_w2, (16, num_labels), dtype=jnp.float32) * 0.1
    b2 = jax.random.normal(k_b2, (num_labels,), dtype=jnp.float32) * 0.1

    # --- test 1: one-shot API, single grid step, exact f32 check ---
    ref = reference_forward(x_ids, emb_table, w1, b1, w2, b2)
    out = jax.block_until_ready(dense_network_forward(x_ids, emb_table, w1, b1, w2, b2))
    assert out.shape == (B, num_labels), out.shape
    assert jnp.allclose(out, ref, atol=1e-4, rtol=1e-4), (out, ref)

    # --- test 2: hoisted prep + multi-step grid (B=20, TB=8 -> 3 grid steps, padded tail) ---
    B2 = 20
    x_ids2 = jax.random.randint(k_ids2, (B2, S), 0, V, dtype=jnp.int32)
    ref2 = reference_forward(x_ids2, emb_table, w1, b1, w2, b2)
    params = prepare_dense_network_params(emb_table, w1, b1, w2, b2,
                                          compute_dtype=jnp.float32)   # one-time prep
    out2 = jax.block_until_ready(
        dense_network_forward_prepared(x_ids2, params, block_b=8))
    assert out2.shape == (B2, num_labels), out2.shape
    assert jnp.allclose(out2, ref2, atol=1e-4, rtol=1e-4), (out2, ref2)

    print("KERNEL_OK")
</pallas_src>

<mosaic_0001>
module attributes {stable_mosaic.version = 11 : i64} {
  func.func @kernel(%arg0: i32, %arg1: memref<8x8xi32, #tpu.memory_space<smem>>, %arg2: memref<32x128xf32, #tpu.memory_space<vmem>>, %arg3: memref<1x128xf32, #tpu.memory_space<vmem>>, %arg4: memref<128x128xf32, #tpu.memory_space<vmem>>, %arg5: memref<1x128xf32, #tpu.memory_space<vmem>>, %arg6: memref<8x128xf32, #tpu.memory_space<vmem>>, %arg7: memref<8x128xf32, #tpu.memory_space<vmem>>) attributes {dimension_semantics = [#tpu.dimension_semantics<parallel>], iteration_bounds = array<i64: 1>, scalar_prefetch = 1 : i64, scratch_operands = 1 : i64, tpu.core_type = #tpu.core_type<tc>, window_params = [{pipeline_mode = #tpu.pipeline_mode<synchronous>, transform_indices = @transform_0, window_bounds = array<i64: 32, 128>}, {pipeline_mode = #tpu.pipeline_mode<synchronous>, transform_indices = @transform_1, window_bounds = array<i64: 1, 128>}, {pipeline_mode = #tpu.pipeline_mode<synchronous>, transform_indices = @transform_2, window_bounds = array<i64: 128, 128>}, {pipeline_mode = #tpu.pipeline_mode<synchronous>, transform_indices = @transform_3, window_bounds = array<i64: 1, 128>}, {transform_indices = @transform_4, window_bounds = array<i64: 8, 128>}]} {
    %c8_i32 = arith.constant 8 : i32
    %0 = arith.muli %arg0, %c8_i32 : i32
    %c0_i32 = arith.constant 0 : i32
    %c1_i32 = arith.constant 1 : i32
    %1 = arith.muli %c0_i32, %c1_i32 : i32
    %c0_i32_0 = arith.constant 0 : i32
    %2 = arith.addi %c0_i32_0, %1 : i32
    %c8_i32_1 = arith.constant 8 : i32
    %3 = arith.muli %2, %c8_i32_1 : i32
    %4 = tpu.assume_multiple %3, 8 : i32
    %cst = arith.constant 0.000000e+00 : f32
    %5 = vector.broadcast %cst : f32 to vector<1x128xf32>
    %c0_i32_2 = arith.constant 0 : i32
    %c8_i32_3 = arith.constant 8 : i32
    %6 = arith.addi %c0_i32_2, %c8_i32_3 : i32
    %c1_i32_4 = arith.constant 1 : i32
    %7 = scf.for %arg8 = %c0_i32_2 to %6 step %c1_i32_4 iter_args(%arg9 = %5) -> (vector<1x128xf32>)  : i32 {
      %44 = arith.addi %0, %4 : i32
      %c0_i32_54 = arith.constant 0 : i32
      %45 = arith.addi %44, %c0_i32_54 : i32
      %46 = arith.index_cast %45 : i32 to index
      %47 = arith.index_cast %arg8 : i32 to index
      %48 = memref.load %arg1[%46, %47] : memref<8x8xi32, #tpu.memory_space<smem>>
      %c0_i32_55 = arith.constant 0 : i32
      %49 = arith.maxsi %48, %c0_i32_55 : i32
      %c31_i32 = arith.constant 31 : i32
      %50 = arith.minsi %49, %c31_i32 : i32
      %51 = arith.index_cast %50 : i32 to index
      %c0_56 = arith.constant 0 : index
      %52 = vector.load %arg2[%51, %c0_56] : memref<32x128xf32, #tpu.memory_space<vmem>>, vector<1x128xf32>
      %53 = arith.addf %arg9, %52 : vector<1x128xf32>
      scf.yield %53 : vector<1x128xf32>
    }
    %c8_i32_5 = arith.constant 8 : i32
    %cst_6 = arith.constant 0.000000e+00 : f32
    %8 = vector.broadcast %cst_6 : f32 to vector<1x128xf32>
    %c0_i32_7 = arith.constant 0 : i32
    %c8_i32_8 = arith.constant 8 : i32
    %9 = arith.addi %c0_i32_7, %c8_i32_8 : i32
    %c1_i32_9 = arith.constant 1 : i32
    %10 = scf.for %arg8 = %c0_i32_7 to %9 step %c1_i32_9 iter_args(%arg9 = %8) -> (vector<1x128xf32>)  : i32 {
      %44 = arith.addi %0, %4 : i32
      %c1_i32_54 = arith.constant 1 : i32
      %45 = arith.addi %44, %c1_i32_54 : i32
      %46 = arith.index_cast %45 : i32 to index
      %47 = arith.index_cast %arg8 : i32 to index
      %48 = memref.load %arg1[%46, %47] : memref<8x8xi32, #tpu.memory_space<smem>>
      %c0_i32_55 = arith.constant 0 : i32
      %49 = arith.maxsi %48, %c0_i32_55 : i32
      %c31_i32 = arith.constant 31 : i32
      %50 = arith.minsi %49, %c31_i32 : i32
      %51 = arith.index_cast %50 : i32 to index
      %c0_56 = arith.constant 0 : index
      %52 = vector.load %arg2[%51, %c0_56] : memref<32x128xf32, #tpu.memory_space<vmem>>, vector<1x128xf32>
      %53 = arith.addf %arg9, %52 : vector<1x128xf32>
      scf.yield %53 : vector<1x128xf32>
    }
    %c8_i32_10 = arith.constant 8 : i32
    %cst_11 = arith.constant 0.000000e+00 : f32
    %11 = vector.broadcast %cst_11 : f32 to vector<1x128xf32>
    %c0_i32_12 = arith.constant 0 : i32
    %c8_i32_13 = arith.constant 8 : i32
    %12 = arith.addi %c0_i32_12, %c8_i32_13 : i32
    %c1_i32_14 = arith.constant 1 : i32
    %13 = scf.for %arg8 = %c0_i32_12 to %12 step %c1_i32_14 iter_args(%arg9 = %11) -> (vector<1x128xf32>)  : i32 {
      %44 = arith.addi %0, %4 : i32
      %c2_i32 = arith.constant 2 : i32
      %45 = arith.addi %44, %c2_i32 : i32
      %46 = arith.index_cast %45 : i32 to index
      %47 = arith.index_cast %arg8 : i32 to index
      %48 = memref.load %arg1[%46, %47] : memref<8x8xi32, #tpu.memory_space<smem>>
      %c0_i32_54 = arith.constant 0 : i32
      %49 = arith.maxsi %48, %c0_i32_54 : i32
      %c31_i32 = arith.constant 31 : i32
      %50 = arith.minsi %49, %c31_i32 : i32
      %51 = arith.index_cast %50 : i32 to index
      %c0_55 = arith.constant 0 : index
      %52 = vector.load %arg2[%51, %c0_55] : memref<32x128xf32, #tpu.memory_space<vmem>>, vector<1x128xf32>
      %53 = arith.addf %arg9, %52 : vector<1x128xf32>
      scf.yield %53 : vector<1x128xf32>
    }
    %c8_i32_15 = arith.constant 8 : i32
    %cst_16 = arith.constant 0.000000e+00 : f32
    %14 = vector.broadcast %cst_16 : f32 to vector<1x128xf32>
    %c0_i32_17 = arith.constant 0 : i32
    %c8_i32_18 = arith.constant 8 : i32
    %15 = arith.addi %c0_i32_17, %c8_i32_18 : i32
    %c1_i32_19 = arith.constant 1 : i32
    %16 = scf.for %arg8 = %c0_i32_17 to %15 step %c1_i32_19 iter_args(%arg9 = %14) -> (vector<1x128xf32>)  : i32 {
      %44 = arith.addi %0, %4 : i32
      %c3_i32 = arith.constant 3 : i32
      %45 = arith.addi %44, %c3_i32 : i32
      %46 = arith.index_cast %45 : i32 to index
      %47 = arith.index_cast %arg8 : i32 to index
      %48 = memref.load %arg1[%46, %47] : memref<8x8xi32, #tpu.memory_space<smem>>
      %c0_i32_54 = arith.constant 0 : i32
      %49 = arith.maxsi %48, %c0_i32_54 : i32
      %c31_i32 = arith.constant 31 : i32
      %50 = arith.minsi %49, %c31_i32 : i32
      %51 = arith.index_cast %50 : i32 to index
      %c0_55 = arith.constant 0 : index
      %52 = vector.load %arg2[%51, %c0_55] : memref<32x128xf32, #tpu.memory_space<vmem>>, vector<1x128xf32>
      %53 = arith.addf %arg9, %52 : vector<1x128xf32>
      scf.yield %53 : vector<1x128xf32>
    }
    %c8_i32_20 = arith.constant 8 : i32
    %cst_21 = arith.constant 0.000000e+00 : f32
    %17 = vector.broadcast %cst_21 : f32 to vector<1x128xf32>
    %c0_i32_22 = arith.constant 0 : i32
    %c8_i32_23 = arith.constant 8 : i32
    %18 = arith.addi %c0_i32_22, %c8_i32_23 : i32
    %c1_i32_24 = arith.constant 1 : i32
    %19 = scf.for %arg8 = %c0_i32_22 to %18 step %c1_i32_24 iter_args(%arg9 = %17) -> (vector<1x128xf32>)  : i32 {
      %44 = arith.addi %0, %4 : i32
      %c4_i32 = arith.constant 4 : i32
      %45 = arith.addi %44, %c4_i32 : i32
      %46 = arith.index_cast %45 : i32 to index
      %47 = arith.index_cast %arg8 : i32 to index
      %48 = memref.load %arg1[%46, %47] : memref<8x8xi32, #tpu.memory_space<smem>>
      %c0_i32_54 = arith.constant 0 : i32
      %49 = arith.maxsi %48, %c0_i32_54 : i32
      %c31_i32 = arith.constant 31 : i32
      %50 = arith.minsi %49, %c31_i32 : i32
      %51 = arith.index_cast %50 : i32 to index
      %c0_55 = arith.constant 0 : index
      %52 = vector.load %arg2[%51, %c0_55] : memref<32x128xf32, #tpu.memory_space<vmem>>, vector<1x128xf32>
      %53 = arith.addf %arg9, %52 : vector<1x128xf32>
      scf.yield %53 : vector<1x128xf32>
    }
    %c8_i32_25 = arith.constant 8 : i32
    %cst_26 = arith.constant 0.000000e+00 : f32
    %20 = vector.broadcast %cst_26 : f32 to vector<1x128xf32>
    %c0_i32_27 = arith.constant 0 : i32
    %c8_i32_28 = arith.constant 8 : i32
    %21 = arith.addi %c0_i32_27, %c8_i32_28 : i32
    %c1_i32_29 = arith.constant 1 : i32
    %22 = scf.for %arg8 = %c0_i32_27 to %21 step %c1_i32_29 iter_args(%arg9 = %20) -> (vector<1x128xf32>)  : i32 {
      %44 = arith.addi %0, %4 : i32
      %c5_i32 = arith.constant 5 : i32
      %45 = arith.addi %44, %c5_i32 : i32
      %46 = arith.index_cast %45 : i32 to index
      %47 = arith.index_cast %arg8 : i32 to index
      %48 = memref.load %arg1[%46, %47] : memref<8x8xi32, #tpu.memory_space<smem>>
      %c0_i32_54 = arith.constant 0 : i32
      %49 = arith.maxsi %48, %c0_i32_54 : i32
      %c31_i32 = arith.constant 31 : i32
      %50 = arith.minsi %49, %c31_i32 : i32
      %51 = arith.index_cast %50 : i32 to index
      %c0_55 = arith.constant 0 : index
      %52 = vector.load %arg2[%51, %c0_55] : memref<32x128xf32, #tpu.memory_space<vmem>>, vector<1x128xf32>
      %53 = arith.addf %arg9, %52 : vector<1x128xf32>
      scf.yield %53 : vector<1x128xf32>
    }
    %c8_i32_30 = arith.constant 8 : i32
    %cst_31 = arith.constant 0.000000e+00 : f32
    %23 = vector.broadcast %cst_31 : f32 to vector<1x128xf32>
    %c0_i32_32 = arith.constant 0 : i32
    %c8_i32_33 = arith.constant 8 : i32
    %24 = arith.addi %c0_i32_32, %c8_i32_33 : i32
    %c1_i32_34 = arith.constant 1 : i32
    %25 = scf.for %arg8 = %c0_i32_32 to %24 step %c1_i32_34 iter_args(%arg9 = %23) -> (vector<1x128xf32>)  : i32 {
      %44 = arith.addi %0, %4 : i32
      %c6_i32 = arith.constant 6 : i32
      %45 = arith.addi %44, %c6_i32 : i32
      %46 = arith.index_cast %45 : i32 to index
      %47 = arith.index_cast %arg8 : i32 to index
      %48 = memref.load %arg1[%46, %47] : memref<8x8xi32, #tpu.memory_space<smem>>
      %c0_i32_54 = arith.constant 0 : i32
      %49 = arith.maxsi %48, %c0_i32_54 : i32
      %c31_i32 = arith.constant 31 : i32
      %50 = arith.minsi %49, %c31_i32 : i32
      %51 = arith.index_cast %50 : i32 to index
      %c0_55 = arith.constant 0 : index
      %52 = vector.load %arg2[%51, %c0_55] : memref<32x128xf32, #tpu.memory_space<vmem>>, vector<1x128xf32>
      %53 = arith.addf %arg9, %52 : vector<1x128xf32>
      scf.yield %53 : vector<1x128xf32>
    }
    %c8_i32_35 = arith.constant 8 : i32
    %cst_36 = arith.constant 0.000000e+00 : f32
    %26 = vector.broadcast %cst_36 : f32 to vector<1x128xf32>
    %c0_i32_37 = arith.constant 0 : i32
    %c8_i32_38 = arith.constant 8 : i32
    %27 = arith.addi %c0_i32_37, %c8_i32_38 : i32
    %c1_i32_39 = arith.constant 1 : i32
    %28 = scf.for %arg8 = %c0_i32_37 to %27 step %c1_i32_39 iter_args(%arg9 = %26) -> (vector<1x128xf32>)  : i32 {
      %44 = arith.addi %0, %4 : i32
      %c7_i32 = arith.constant 7 : i32
      %45 = arith.addi %44, %c7_i32 : i32
      %46 = arith.index_cast %45 : i32 to index
      %47 = arith.index_cast %arg8 : i32 to index
      %48 = memref.load %arg1[%46, %47] : memref<8x8xi32, #tpu.memory_space<smem>>
      %c0_i32_54 = arith.constant 0 : i32
      %49 = arith.maxsi %48, %c0_i32_54 : i32
      %c31_i32 = arith.constant 31 : i32
      %50 = arith.minsi %49, %c31_i32 : i32
      %51 = arith.index_cast %50 : i32 to index
      %c0_55 = arith.constant 0 : index
      %52 = vector.load %arg2[%51, %c0_55] : memref<32x128xf32, #tpu.memory_space<vmem>>, vector<1x128xf32>
      %53 = arith.addf %arg9, %52 : vector<1x128xf32>
      scf.yield %53 : vector<1x128xf32>
    }
    %c8_i32_40 = arith.constant 8 : i32
    %29 = tpu.concatenate %7, %10, %13, %16, %19, %22, %25, %28 in 0 : vector<1x128xf32>, vector<1x128xf32>, vector<1x128xf32>, vector<1x128xf32>, vector<1x128xf32>, vector<1x128xf32>, vector<1x128xf32>, vector<1x128xf32> -> vector<8x128xf32>
    %30 = arith.index_cast %4 : i32 to index
    %c0 = arith.constant 0 : index
    %31 = vector.load %arg7[%30, %c0] : memref<8x128xf32, #tpu.memory_space<vmem>>, vector<8x128xf32>
    tpu.vector_store %arg7[%30, %c0], %29 {strides = array<i32>} : memref<8x128xf32, #tpu.memory_space<vmem>>, vector<8x128xf32>,
    %c1_i32_41 = arith.constant 1 : i32
    %c0_42 = arith.constant 0 : index
    %c0_43 = arith.constant 0 : index
    %32 = vector.load %arg7[%c0_42, %c0_43] : memref<8x128xf32, #tpu.memory_space<vmem>>, vector<8x128xf32>
    %c0_44 = arith.constant 0 : index
    %c0_45 = arith.constant 0 : index
    %33 = vector.load %arg3[%c0_44, %c0_45] : memref<1x128xf32, #tpu.memory_space<vmem>>, vector<1x128xf32>
    %34 = vector.broadcast %33 : vector<1x128xf32> to vector<8x128xf32>
    %35 = arith.addf %32, %34 : vector<8x128xf32>
    %cst_46 = arith.constant 0.000000e+00 : f32
    %36 = vector.broadcast %cst_46 : f32 to vector<8x128xf32>
    %37 = arith.maximumf %35, %36 : vector<8x128xf32>
    %c0_47 = arith.constant 0 : index
    %c0_48 = arith.constant 0 : index
    %38 = vector.load %arg4[%c0_47, %c0_48] : memref<128x128xf32, #tpu.memory_space<vmem>>, vector<128x128xf32>
    %cst_49 = arith.constant dense<0.000000e+00> : vector<8x128xf32>
    %39 = tpu.matmul %37, %38, %cst_49 {dimension_numbers = #tpu.dot_dimension_numbers<[1], [0], [0], [1], [0, 0, 1, 1], [], []>} : vector<8x128xf32>, vector<128x128xf32>, vector<8x128xf32> -> vector<8x128xf32>
    %c0_50 = arith.constant 0 : index
    %c0_51 = arith.constant 0 : index
    %40 = vector.load %arg5[%c0_50, %c0_51] : memref<1x128xf32, #tpu.memory_space<vmem>>, vector<1x128xf32>
    %41 = vector.broadcast %40 : vector<1x128xf32> to vector<8x128xf32>
    %42 = arith.addf %39, %41 : vector<8x128xf32>
    %c0_52 = arith.constant 0 : index
    %c0_53 = arith.constant 0 : index
    %43 = vector.load %arg6[%c0_52, %c0_53] : memref<8x128xf32, #tpu.memory_space<vmem>>, vector<8x128xf32>
    tpu.vector_store %arg6[%c0_52, %c0_53], %42 {strides = array<i32>} : memref<8x128xf32, #tpu.memory_space<vmem>>, vector<8x128xf32>,
    return
  }
  func.func @transform_0(%arg0: i32, %arg1: memref<8x8xi32, #tpu.memory_space<smem>>) -> (i32, i32) {
    %c0_i32 = arith.constant 0 : i32
    %c0_i32_0 = arith.constant 0 : i32
    %c0_i32_1 = arith.constant 0 : i32
    return %c0_i32, %c0_i32_0 : i32, i32
  }
  func.func @transform_1(%arg0: i32, %arg1: memref<8x8xi32, #tpu.memory_space<smem>>) -> (i32, i32) {
    %c0_i32 = arith.constant 0 : i32
    %c0_i32_0 = arith.constant 0 : i32
    %c0_i32_1 = arith.constant 0 : i32
    return %c0_i32, %c0_i32_0 : i32, i32
  }
  func.func @transform_2(%arg0: i32, %arg1: memref<8x8xi32, #tpu.memory_space<smem>>) -> (i32, i32) {
    %c0_i32 = arith.constant 0 : i32
    %c0_i32_0 = arith.constant 0 : i32
    %c0_i32_1 = arith.constant 0 : i32
    return %c0_i32, %c0_i32_0 : i32, i32
  }
  func.func @transform_3(%arg0: i32, %arg1: memref<8x8xi32, #tpu.memory_space<smem>>) -> (i32, i32) {
    %c0_i32 = arith.constant 0 : i32
    %c0_i32_0 = arith.constant 0 : i32
    %c0_i32_1 = arith.constant 0 : i32
    return %c0_i32, %c0_i32_0 : i32, i32
  }
  func.func @transform_4(%arg0: i32, %arg1: memref<8x8xi32, #tpu.memory_space<smem>>) -> (i32, i32) {
    %c0_i32 = arith.constant 0 : i32
    %c0_i32_0 = arith.constant 0 : i32
    return %arg0, %c0_i32 : i32, i32
  }
}

module attributes {stable_mosaic.version = 11 : i64} {
  func.func @kernel(%arg0: i32, %arg1: memref<8x8xi32, #tpu.memory_space<smem>>, %arg2: memref<32x128xf32, #tpu.memory_space<vmem>>, %arg3: memref<1x128xf32, #tpu.memory_space<vmem>>, %arg4: memref<128x128xf32, #tpu.memory_space<vmem>>, %arg5: memref<1x128xf32, #tpu.memory_space<vmem>>, %arg6: memref<8x128xf32, #tpu.memory_space<vmem>>, %arg7: memref<8x128xf32, #tpu.memory_space<vmem>>) attributes {dimension_semantics = [#tpu.dimension_semantics<parallel>], iteration_bounds = array<i64: 1>, scalar_prefetch = 1 : i64, scratch_operands = 1 : i64, tpu.core_type = #tpu.core_type<tc>, window_params = [{pipeline_mode = #tpu.pipeline_mode<synchronous>, transform_indices = @transform_0, window_bounds = array<i64: 32, 128>}, {pipeline_mode = #tpu.pipeline_mode<synchronous>, transform_indices = @transform_1, window_bounds = array<i64: 1, 128>}, {pipeline_mode = #tpu.pipeline_mode<synchronous>, transform_indices = @transform_2, window_bounds = array<i64: 128, 128>}, {pipeline_mode = #tpu.pipeline_mode<synchronous>, transform_indices = @transform_3, window_bounds = array<i64: 1, 128>}, {transform_indices = @transform_4, window_bounds = array<i64: 8, 128>}]} {
    %c8_i32 = arith.constant 8 : i32
    %0 = arith.muli %arg0, %c8_i32 : i32
    %c0_i32 = arith.constant 0 : i32
    %c1_i32 = arith.constant 1 : i32
    %1 = arith.muli %c0_i32, %c1_i32 : i32
    %c0_i32_0 = arith.constant 0 : i32
    %2 = arith.addi %c0_i32_0, %1 : i32
    %c8_i32_1 = arith.constant 8 : i32
    %3 = arith.muli %2, %c8_i32_1 : i32
    %4 = tpu.assume_multiple %3, 8 : i32
    %cst = arith.constant 0.000000e+00 : f32
    %5 = vector.broadcast %cst : f32 to vector<1x128xf32>
    %c0_i32_2 = arith.constant 0 : i32
    %c8_i32_3 = arith.constant 8 : i32
    %6 = arith.addi %c0_i32_2, %c8_i32_3 : i32
    %c1_i32_4 = arith.constant 1 : i32
    %7 = scf.for %arg8 = %c0_i32_2 to %6 step %c1_i32_4 iter_args(%arg9 = %5) -> (vector<1x128xf32>)  : i32 {
      %44 = arith.addi %0, %4 : i32
      %c0_i32_54 = arith.constant 0 : i32
      %45 = arith.addi %44, %c0_i32_54 : i32
      %46 = arith.index_cast %45 : i32 to index
      %47 = arith.index_cast %arg8 : i32 to index
      %48 = memref.load %arg1[%46, %47] : memref<8x8xi32, #tpu.memory_space<smem>>
      %c0_i32_55 = arith.constant 0 : i32
      %49 = arith.maxsi %48, %c0_i32_55 : i32
      %c31_i32 = arith.constant 31 : i32
      %50 = arith.minsi %49, %c31_i32 : i32
      %51 = arith.index_cast %50 : i32 to index
      %c0_56 = arith.constant 0 : index
      %52 = vector.load %arg2[%51, %c0_56] : memref<32x128xf32, #tpu.memory_space<vmem>>, vector<1x128xf32>
      %53 = arith.addf %arg9, %52 : vector<1x128xf32>
      scf.yield %53 : vector<1x128xf32>
    }
    %c8_i32_5 = arith.constant 8 : i32
    %cst_6 = arith.constant 0.000000e+00 : f32
    %8 = vector.broadcast %cst_6 : f32 to vector<1x128xf32>
    %c0_i32_7 = arith.constant 0 : i32
    %c8_i32_8 = arith.constant 8 : i32
    %9 = arith.addi %c0_i32_7, %c8_i32_8 : i32
    %c1_i32_9 = arith.constant 1 : i32
    %10 = scf.for %arg8 = %c0_i32_7 to %9 step %c1_i32_9 iter_args(%arg9 = %8) -> (vector<1x128xf32>)  : i32 {
      %44 = arith.addi %0, %4 : i32
      %c1_i32_54 = arith.constant 1 : i32
      %45 = arith.addi %44, %c1_i32_54 : i32
      %46 = arith.index_cast %45 : i32 to index
      %47 = arith.index_cast %arg8 : i32 to index
      %48 = memref.load %arg1[%46, %47] : memref<8x8xi32, #tpu.memory_space<smem>>
      %c0_i32_55 = arith.constant 0 : i32
      %49 = arith.maxsi %48, %c0_i32_55 : i32
      %c31_i32 = arith.constant 31 : i32
      %50 = arith.minsi %49, %c31_i32 : i32
      %51 = arith.index_cast %50 : i32 to index
      %c0_56 = arith.constant 0 : index
      %52 = vector.load %arg2[%51, %c0_56] : memref<32x128xf32, #tpu.memory_space<vmem>>, vector<1x128xf32>
      %53 = arith.addf %arg9, %52 : vector<1x128xf32>
      scf.yield %53 : vector<1x128xf32>
    }
    %c8_i32_10 = arith.constant 8 : i32
    %cst_11 = arith.constant 0.000000e+00 : f32
    %11 = vector.broadcast %cst_11 : f32 to vector<1x128xf32>
    %c0_i32_12 = arith.constant 0 : i32
    %c8_i32_13 = arith.constant 8 : i32
    %12 = arith.addi %c0_i32_12, %c8_i32_13 : i32
    %c1_i32_14 = arith.constant 1 : i32
    %13 = scf.for %arg8 = %c0_i32_12 to %12 step %c1_i32_14 iter_args(%arg9 = %11) -> (vector<1x128xf32>)  : i32 {
      %44 = arith.addi %0, %4 : i32
      %c2_i32 = arith.constant 2 : i32
      %45 = arith.addi %44, %c2_i32 : i32
      %46 = arith.index_cast %45 : i32 to index
      %47 = arith.index_cast %arg8 : i32 to index
      %48 = memref.load %arg1[%46, %47] : memref<8x8xi32, #tpu.memory_space<smem>>
      %c0_i32_54 = arith.constant 0 : i32
      %49 = arith.maxsi %48, %c0_i32_54 : i32
      %c31_i32 = arith.constant 31 : i32
      %50 = arith.minsi %49, %c31_i32 : i32
      %51 = arith.index_cast %50 : i32 to index
      %c0_55 = arith.constant 0 : index
      %52 = vector.load %arg2[%51, %c0_55] : memref<32x128xf32, #tpu.memory_space<vmem>>, vector<1x128xf32>
      %53 = arith.addf %arg9, %52 : vector<1x128xf32>
      scf.yield %53 : vector<1x128xf32>
    }
    %c8_i32_15 = arith.constant 8 : i32
    %cst_16 = arith.constant 0.000000e+00 : f32
    %14 = vector.broadcast %cst_16 : f32 to vector<1x128xf32>
    %c0_i32_17 = arith.constant 0 : i32
    %c8_i32_18 = arith.constant 8 : i32
    %15 = arith.addi %c0_i32_17, %c8_i32_18 : i32
    %c1_i32_19 = arith.constant 1 : i32
    %16 = scf.for %arg8 = %c0_i32_17 to %15 step %c1_i32_19 iter_args(%arg9 = %14) -> (vector<1x128xf32>)  : i32 {
      %44 = arith.addi %0, %4 : i32
      %c3_i32 = arith.constant 3 : i32
      %45 = arith.addi %44, %c3_i32 : i32
      %46 = arith.index_cast %45 : i32 to index
      %47 = arith.index_cast %arg8 : i32 to index
      %48 = memref.load %arg1[%46, %47] : memref<8x8xi32, #tpu.memory_space<smem>>
      %c0_i32_54 = arith.constant 0 : i32
      %49 = arith.maxsi %48, %c0_i32_54 : i32
      %c31_i32 = arith.constant 31 : i32
      %50 = arith.minsi %49, %c31_i32 : i32
      %51 = arith.index_cast %50 : i32 to index
      %c0_55 = arith.constant 0 : index
      %52 = vector.load %arg2[%51, %c0_55] : memref<32x128xf32, #tpu.memory_space<vmem>>, vector<1x128xf32>
      %53 = arith.addf %arg9, %52 : vector<1x128xf32>
      scf.yield %53 : vector<1x128xf32>
    }
    %c8_i32_20 = arith.constant 8 : i32
    %cst_21 = arith.constant 0.000000e+00 : f32
    %17 = vector.broadcast %cst_21 : f32 to vector<1x128xf32>
    %c0_i32_22 = arith.constant 0 : i32
    %c8_i32_23 = arith.constant 8 : i32
    %18 = arith.addi %c0_i32_22, %c8_i32_23 : i32
    %c1_i32_24 = arith.constant 1 : i32
    %19 = scf.for %arg8 = %c0_i32_22 to %18 step %c1_i32_24 iter_args(%arg9 = %17) -> (vector<1x128xf32>)  : i32 {
      %44 = arith.addi %0, %4 : i32
      %c4_i32 = arith.constant 4 : i32
      %45 = arith.addi %44, %c4_i32 : i32
      %46 = arith.index_cast %45 : i32 to index
      %47 = arith.index_cast %arg8 : i32 to index
      %48 = memref.load %arg1[%46, %47] : memref<8x8xi32, #tpu.memory_space<smem>>
      %c0_i32_54 = arith.constant 0 : i32
      %49 = arith.maxsi %48, %c0_i32_54 : i32
      %c31_i32 = arith.constant 31 : i32
      %50 = arith.minsi %49, %c31_i32 : i32
      %51 = arith.index_cast %50 : i32 to index
      %c0_55 = arith.constant 0 : index
      %52 = vector.load %arg2[%51, %c0_55] : memref<32x128xf32, #tpu.memory_space<vmem>>, vector<1x128xf32>
      %53 = arith.addf %arg9, %52 : vector<1x128xf32>
      scf.yield %53 : vector<1x128xf32>
    }
    %c8_i32_25 = arith.constant 8 : i32
    %cst_26 = arith.constant 0.000000e+00 : f32
    %20 = vector.broadcast %cst_26 : f32 to vector<1x128xf32>
    %c0_i32_27 = arith.constant 0 : i32
    %c8_i32_28 = arith.constant 8 : i32
    %21 = arith.addi %c0_i32_27, %c8_i32_28 : i32
    %c1_i32_29 = arith.constant 1 : i32
    %22 = scf.for %arg8 = %c0_i32_27 to %21 step %c1_i32_29 iter_args(%arg9 = %20) -> (vector<1x128xf32>)  : i32 {
      %44 = arith.addi %0, %4 : i32
      %c5_i32 = arith.constant 5 : i32
      %45 = arith.addi %44, %c5_i32 : i32
      %46 = arith.index_cast %45 : i32 to index
      %47 = arith.index_cast %arg8 : i32 to index
      %48 = memref.load %arg1[%46, %47] : memref<8x8xi32, #tpu.memory_space<smem>>
      %c0_i32_54 = arith.constant 0 : i32
      %49 = arith.maxsi %48, %c0_i32_54 : i32
      %c31_i32 = arith.constant 31 : i32
      %50 = arith.minsi %49, %c31_i32 : i32
      %51 = arith.index_cast %50 : i32 to index
      %c0_55 = arith.constant 0 : index
      %52 = vector.load %arg2[%51, %c0_55] : memref<32x128xf32, #tpu.memory_space<vmem>>, vector<1x128xf32>
      %53 = arith.addf %arg9, %52 : vector<1x128xf32>
      scf.yield %53 : vector<1x128xf32>
    }
    %c8_i32_30 = arith.constant 8 : i32
    %cst_31 = arith.constant 0.000000e+00 : f32
    %23 = vector.broadcast %cst_31 : f32 to vector<1x128xf32>
    %c0_i32_32 = arith.constant 0 : i32
    %c8_i32_33 = arith.constant 8 : i32
    %24 = arith.addi %c0_i32_32, %c8_i32_33 : i32
    %c1_i32_34 = arith.constant 1 : i32
    %25 = scf.for %arg8 = %c0_i32_32 to %24 step %c1_i32_34 iter_args(%arg9 = %23) -> (vector<1x128xf32>)  : i32 {
      %44 = arith.addi %0, %4 : i32
      %c6_i32 = arith.constant 6 : i32
      %45 = arith.addi %44, %c6_i32 : i32
      %46 = arith.index_cast %45 : i32 to index
      %47 = arith.index_cast %arg8 : i32 to index
      %48 = memref.load %arg1[%46, %47] : memref<8x8xi32, #tpu.memory_space<smem>>
      %c0_i32_54 = arith.constant 0 : i32
      %49 = arith.maxsi %48, %c0_i32_54 : i32
      %c31_i32 = arith.constant 31 : i32
      %50 = arith.minsi %49, %c31_i32 : i32
      %51 = arith.index_cast %50 : i32 to index
      %c0_55 = arith.constant 0 : index
      %52 = vector.load %arg2[%51, %c0_55] : memref<32x128xf32, #tpu.memory_space<vmem>>, vector<1x128xf32>
      %53 = arith.addf %arg9, %52 : vector<1x128xf32>
      scf.yield %53 : vector<1x128xf32>
    }
    %c8_i32_35 = arith.constant 8 : i32
    %cst_36 = arith.constant 0.000000e+00 : f32
    %26 = vector.broadcast %cst_36 : f32 to vector<1x128xf32>
    %c0_i32_37 = arith.constant 0 : i32
    %c8_i32_38 = arith.constant 8 : i32
    %27 = arith.addi %c0_i32_37, %c8_i32_38 : i32
    %c1_i32_39 = arith.constant 1 : i32
    %28 = scf.for %arg8 = %c0_i32_37 to %27 step %c1_i32_39 iter_args(%arg9 = %26) -> (vector<1x128xf32>)  : i32 {
      %44 = arith.addi %0, %4 : i32
      %c7_i32 = arith.constant 7 : i32
      %45 = arith.addi %44, %c7_i32 : i32
      %46 = arith.index_cast %45 : i32 to index
      %47 = arith.index_cast %arg8 : i32 to index
      %48 = memref.load %arg1[%46, %47] : memref<8x8xi32, #tpu.memory_space<smem>>
      %c0_i32_54 = arith.constant 0 : i32
      %49 = arith.maxsi %48, %c0_i32_54 : i32
      %c31_i32 = arith.constant 31 : i32
      %50 = arith.minsi %49, %c31_i32 : i32
      %51 = arith.index_cast %50 : i32 to index
      %c0_55 = arith.constant 0 : index
      %52 = vector.load %arg2[%51, %c0_55] : memref<32x128xf32, #tpu.memory_space<vmem>>, vector<1x128xf32>
      %53 = arith.addf %arg9, %52 : vector<1x128xf32>
      scf.yield %53 : vector<1x128xf32>
    }
    %c8_i32_40 = arith.constant 8 : i32
    %29 = tpu.concatenate %7, %10, %13, %16, %19, %22, %25, %28 in 0 : vector<1x128xf32>, vector<1x128xf32>, vector<1x128xf32>, vector<1x128xf32>, vector<1x128xf32>, vector<1x128xf32>, vector<1x128xf32>, vector<1x128xf32> -> vector<8x128xf32>
    %30 = arith.index_cast %4 : i32 to index
    %c0 = arith.constant 0 : index
    %31 = vector.load %arg7[%30, %c0] : memref<8x128xf32, #tpu.memory_space<vmem>>, vector<8x128xf32>
    tpu.vector_store %arg7[%30, %c0], %29 {strides = array<i32>} : memref<8x128xf32, #tpu.memory_space<vmem>>, vector<8x128xf32>,
    %c1_i32_41 = arith.constant 1 : i32
    %c0_42 = arith.constant 0 : index
    %c0_43 = arith.constant 0 : index
    %32 = vector.load %arg7[%c0_42, %c0_43] : memref<8x128xf32, #tpu.memory_space<vmem>>, vector<8x128xf32>
    %c0_44 = arith.constant 0 : index
    %c0_45 = arith.constant 0 : index
    %33 = vector.load %arg3[%c0_44, %c0_45] : memref<1x128xf32, #tpu.memory_space<vmem>>, vector<1x128xf32>
    %34 = vector.broadcast %33 : vector<1x128xf32> to vector<8x128xf32>
    %35 = arith.addf %32, %34 : vector<8x128xf32>
    %cst_46 = arith.constant 0.000000e+00 : f32
    %36 = vector.broadcast %cst_46 : f32 to vector<8x128xf32>
    %37 = arith.maximumf %35, %36 : vector<8x128xf32>
    %c0_47 = arith.constant 0 : index
    %c0_48 = arith.constant 0 : index
    %38 = vector.load %arg4[%c0_47, %c0_48] : memref<128x128xf32, #tpu.memory_space<vmem>>, vector<128x128xf32>
    %cst_49 = arith.constant dense<0.000000e+00> : vector<8x128xf32>
    %39 = tpu.matmul %37, %38, %cst_49 {dimension_numbers = #tpu.dot_dimension_numbers<[1], [0], [0], [1], [0, 0, 1, 1], [], []>} : vector<8x128xf32>, vector<128x128xf32>, vector<8x128xf32> -> vector<8x128xf32>
    %c0_50 = arith.constant 0 : index
    %c0_51 = arith.constant 0 : index
    %40 = vector.load %arg5[%c0_50, %c0_51] : memref<1x128xf32, #tpu.memory_space<vmem>>, vector<1x128xf32>
    %41 = vector.broadcast %40 : vector<1x128xf32> to vector<8x128xf32>
    %42 = arith.addf %39, %41 : vector<8x128xf32>
    %c0_52 = arith.constant 0 : index
    %c0_53 = arith.constant 0 : index
    %43 = vector.load %arg6[%c0_52, %c0_53] : memref<8x128xf32, #tpu.memory_space<vmem>>, vector<8x128xf32>
    tpu.vector_store %arg6[%c0_52, %c0_53], %42 {strides = array<i32>} : memref<8x128xf32, #tpu.memory_space<vmem>>, vector<8x128xf32>,
    return
  }
  func.func @transform_0(%arg0: i32, %arg1: memref<8x8xi32, #tpu.memory_space<smem>>) -> (i32, i32) {
    %c0_i32 = arith.constant 0 : i32
    %c0_i32_0 = arith.constant 0 : i32
    %c0_i32_1 = arith.constant 0 : i32
    return %c0_i32, %c0_i32_0 : i32, i32
  }
  func.func @transform_1(%arg0: i32, %arg1: memref<8x8xi32, #tpu.memory_space<smem>>) -> (i32, i32) {
    %c0_i32 = arith.constant 0 : i32
    %c0_i32_0 = arith.constant 0 : i32
    %c0_i32_1 = arith.constant 0 : i32
    return %c0_i32, %c0_i32_0 : i32, i32
  }
  func.func @transform_2(%arg0: i32, %arg1: memref<8x8xi32, #tpu.memory_space<smem>>) -> (i32, i32) {
    %c0_i32 = arith.constant 0 : i32
    %c0_i32_0 = arith.constant 0 : i32
    %c0_i32_1 = arith.constant 0 : i32
    return %c0_i32, %c0_i32_0 : i32, i32
  }
  func.func @transform_3(%arg0: i32, %arg1: memref<8x8xi32, #tpu.memory_space<smem>>) -> (i32, i32) {
    %c0_i32 = arith.constant 0 : i32
    %c0_i32_0 = arith.constant 0 : i32
    %c0_i32_1 = arith.constant 0 : i32
    return %c0_i32, %c0_i32_0 : i32, i32
  }
  func.func @transform_4(%arg0: i32, %arg1: memref<8x8xi32, #tpu.memory_space<smem>>) -> (i32, i32) {
    %c0_i32 = arith.constant 0 : i32
    %c0_i32_0 = arith.constant 0 : i32
    return %arg0, %c0_i32 : i32, i32
  }
}

</mosaic_0001>

<llo_original>
// kernel: tpu_custom_call.1
$region0: #{tpu_custom_call.1}
  #allocation0 [shape = 'u32[]', space=smem, size = 0x4, offset = 0x4, fixed_abs, tag = 'smem constant byte address 0x4 - core index']
  #allocation1 [shape = 'u32[144,128]{1,0:T(1,128)}', space=vmem, size = 0x12000, scoped, tag = 'internal scratch']
  #allocation2 [shape = 'f32[8,128]{1,0:T(8,128)}', space=vmem, size = 0x1000, scoped, tag = 'scratch operand']
  #allocation3 [shape = 's32[1]{0}', space=sflag, size = 0x4, scoped, tag = 'scoped memory for tpu_custom_call.1']
  #allocation4 [shape = 'u8[4096]{0}', space=smem, size = 0x1000, scoped, tag = 'prefetched SMEM operand 0']
  %s0 = inlined_call_operand.hbm [shape: s32[8,8], index: 0, kind: input, shape index: {}]
  %s1 = inlined_call_operand.hbm [shape: f32[32,128], index: 1, kind: input, shape index: {}]
  %s2 = inlined_call_operand.vmem [shape: f32[1,128], index: 2, kind: input, shape index: {}]
  %s3 = inlined_call_operand.hbm [shape: f32[128,128], index: 3, kind: input, shape index: {}]
  %s4 = inlined_call_operand.vmem [shape: f32[1,128], index: 4, kind: input, shape index: {}]
  %s5 = inlined_call_operand.hbm [shape: f32[8,128], index: 5, kind: output, shape index: {}]
  %s6 = sld [smem:[#allocation0]]
  $region90: #{tpu_custom_call.1} parent=0
    _
  %s8 = ssub.s32 1, %s6
  %s9 = scalar_select 0, %s8, %s6
  %11 = dma.hbm_to_smem %s0, 128, [#allocation4], [#allocation3]
  %12 = dma.done [#allocation3], 128
  %13 = sfence
  $region1: #{tpu_custom_call.1} parent=0
    #allocation5 [shape = 'u8[16384]{0}', space=vmem, size = 0x4000, scoped, tag = 'input window, operand 1, single buffered']
    #allocation6 [shape = 's32[1]{0}', space=sflag, size = 0x4, scoped, tag = 'scoped memory for tpu_custom_call.1']
    #allocation7 [shape = 's32[1]{0}', space=sflag, size = 0x4, scoped, tag = 'scoped memory for tpu_custom_call.1']
    #allocation8 [shape = 'u8[65536]{0}', space=vmem, size = 0x10000, scoped, tag = 'input window, operand 3, single buffered']
    #allocation9 [shape = 's32[1]{0}', space=sflag, size = 0x4, scoped, tag = 'scoped memory for tpu_custom_call.1']
    #allocation10 [shape = 'u8[4096]{0}', space=vmem, size = 0x1000, scoped, tag = 'output window, operand 0, single buffered']
    %14 = vsyncpa [#allocation6], 0
    %15 = vsyncpa [#allocation9], 0
    %16 = vsyncpa [#allocation7], 0
    // Predicated region
    $region2: #{tpu_custom_call.1} parent=1 // pred_check
      _
    $region3: #{tpu_custom_call.1} parent=1 // pred_check_branch
      %18 = sbr.rel (0) target = $region5
    $region4: #{tpu_custom_call.1} parent=1 // pred_region
      %s20 = ssub.s32 512, 512
      %21 = vsyncadd [#allocation6], %s20
      %s22 = sshll.u32 [#allocation5], 4
      %s23 = int_to_ptr.vmem [resolvable:$true] %s22
      %28 = dma.hbm_to_vmem [thread:$0]  %s1, 512, %s23, [#allocation6], 128, 128, 8
    $region5: #{tpu_custom_call.1} parent=1 // pred_fallthru
      _
    // Predicated region
    $region6: #{tpu_custom_call.1} parent=1 // pred_check
      _
    $region7: #{tpu_custom_call.1} parent=1 // pred_check_branch
      %30 = sbr.rel (0) target = $region9
    $region8: #{tpu_custom_call.1} parent=1 // pred_region
      _
    $region9: #{tpu_custom_call.1} parent=1 // pred_fallthru
      _
    // Predicated region
    $region10: #{tpu_custom_call.1} parent=1 // pred_check
      _
    $region11: #{tpu_custom_call.1} parent=1 // pred_check_branch
      %32 = sbr.rel (0) target = $region13
    $region12: #{tpu_custom_call.1} parent=1 // pred_region
      %s34 = ssub.s32 2048, 2048
      %35 = vsyncadd [#allocation9], %s34
      %s36 = sshll.u32 [#allocation8], 4
      %s37 = int_to_ptr.vmem [resolvable:$true] %s36
      %42 = dma.hbm_to_vmem [thread:$0]  %s3, 2048, %s37, [#allocation9], 128, 128, 8
    $region13: #{tpu_custom_call.1} parent=1 // pred_fallthru
      _
    // Predicated region
    $region14: #{tpu_custom_call.1} parent=1 // pred_check
      _
    $region15: #{tpu_custom_call.1} parent=1 // pred_check_branch
      %44 = sbr.rel (0) target = $region17
    $region16: #{tpu_custom_call.1} parent=1 // pred_region
      _
    $region17: #{tpu_custom_call.1} parent=1 // pred_fallthru
      _
    // Predicated region
    $region18: #{tpu_custom_call.1} parent=1 // pred_check
      _
    $region19: #{tpu_custom_call.1} parent=1 // pred_check_branch
      %46 = sbr.rel (0) target = $region21
    $region20: #{tpu_custom_call.1} parent=1 // pred_region
      %47 = dma.done [#allocation6], 512
    $region21: #{tpu_custom_call.1} parent=1 // pred_fallthru
      _
    // Predicated region
    $region22: #{tpu_custom_call.1} parent=1 // pred_check
      _
    $region23: #{tpu_custom_call.1} parent=1 // pred_check_branch
      %49 = sbr.rel (0) target = $region25
    $region24: #{tpu_custom_call.1} parent=1 // pred_region
      %50 = dma.done [#allocation9], 2048
    $region25: #{tpu_custom_call.1} parent=1 // pred_fallthru
      _
    %s51 = smul.u32 0, 8
    loop: start=0, step=1, limit=8
    $region26: #{tpu_custom_call.1} parent=1 // loop_pre_header
      _
    $region27: #{tpu_custom_call.1} parent=1 // loop_header
      %s53 = sphi 0, %s57
      %p54 = scmp.ge.s32.totalorder %s53, 8
      %v58 = vphi 0.0, %v74
    $region28: #{tpu_custom_call.1} parent=1 // loop_header_branch
      %56 = sbr.rel (%p54) target = $region32
    $region29: #{tpu_custom_call.1} parent=1 // loop_body
      %s59 = sadd.s32 %s51, 0
      %s60 = sshra.s32 %s53, 7
      %s61 = sand.u32 %s53, 127
      %s62 = sadd.s32 %s60, %s59
      %s63 = smul.u32 %s62, 128
      %s64 = sshra.s32 %s53, 7
      %s65 = sand.u32 %s53, 127
      %s66 = sadd.s32 %s63, %s65
      %s67 = sld [smem:[#allocation4 + %s66]]
      %p68 = scmp.gt.s32.totalorder %s67, 0
      %s69 = scalar_select %p68, %s67, 0
      %p70 = scmp.lt.s32.totalorder %s69, 31
      %s71 = scalar_select %p70, %s69, 31
      %s72 = scalar_lea.vmem [#allocation5], %s71
      %v73 = vld [vmem:[%s72] sm:$0x1]
      %v74 = vadd.f32 %v58, %v73
    $region30: #{tpu_custom_call.1} parent=1 // loop_footer
      %s57 = sadd.s32 1, %s53
    $region31: #{tpu_custom_call.1} parent=1 // loop_footer_branch
      %52 = sbr.rel target = $region27
    $region32: #{tpu_custom_call.1} parent=1 // loop_exit
      _
    loop: start=0, step=1, limit=8
    $region33: #{tpu_custom_call.1} parent=1 // loop_pre_header
      _
    $region34: #{tpu_custom_call.1} parent=1 // loop_header
      %s76 = sphi 0, %s80
      %p77 = scmp.ge.s32.totalorder %s76, 8
      %v81 = vphi 0.0, %v98
    $region35: #{tpu_custom_call.1} parent=1 // loop_header_branch
      %79 = sbr.rel (%p77) target = $region39
    $region36: #{tpu_custom_call.1} parent=1 // loop_body
      %s82 = sadd.s32 %s51, 0
      %s83 = sadd.s32 %s82, 1
      %s84 = sshra.s32 %s76, 7
      %s85 = sand.u32 %s76, 127
      %s86 = sadd.s32 %s84, %s83
      %s87 = smul.u32 %s86, 128
      %s88 = sshra.s32 %s76, 7
      %s89 = sand.u32 %s76, 127
      %s90 = sadd.s32 %s87, %s89
      %s91 = sld [smem:[#allocation4 + %s90]]
      %p92 = scmp.gt.s32.totalorder %s91, 0
      %s93 = scalar_select %p92, %s91, 0
      %p94 = scmp.lt.s32.totalorder %s93, 31
      %s95 = scalar_select %p94, %s93, 31
      %s96 = scalar_lea.vmem [#allocation5], %s95
      %v97 = vld [vmem:[%s96] sm:$0x1]
      %v98 = vadd.f32 %v81, %v97
    $region37: #{tpu_custom_call.1} parent=1 // loop_footer
      %s80 = sadd.s32 1, %s76
    $region38: #{tpu_custom_call.1} parent=1 // loop_footer_branch
      %75 = sbr.rel target = $region34
    $region39: #{tpu_custom_call.1} parent=1 // loop_exit
      _
    loop: start=0, step=1, limit=8
    $region40: #{tpu_custom_call.1} parent=1 // loop_pre_header
      _
    $region41: #{tpu_custom_call.1} parent=1 // loop_header
      %s100 = sphi 0, %s104
      %p101 = scmp.ge.s32.totalorder %s100, 8
      %v105 = vphi 0.0, %v122
    $region42: #{tpu_custom_call.1} parent=1 // loop_header_branch
      %103 = sbr.rel (%p101) target = $region46
    $region43: #{tpu_custom_call.1} parent=1 // loop_body
      %s106 = sadd.s32 %s51, 0
      %s107 = sadd.s32 %s106, 2
      %s108 = sshra.s32 %s100, 7
      %s109 = sand.u32 %s100, 127
      %s110 = sadd.s32 %s108, %s107
      %s111 = smul.u32 %s110, 128
      %s112 = sshra.s32 %s100, 7
      %s113 = sand.u32 %s100, 127
      %s114 = sadd.s32 %s111, %s113
      %s115 = sld [smem:[#allocation4 + %s114]]
      %p116 = scmp.gt.s32.totalorder %s115, 0
      %s117 = scalar_select %p116, %s115, 0
      %p118 = scmp.lt.s32.totalorder %s117, 31
      %s119 = scalar_select %p118, %s117, 31
      %s120 = scalar_lea.vmem [#allocation5], %s119
      %v121 = vld [vmem:[%s120] sm:$0x1]
      %v122 = vadd.f32 %v105, %v121
    $region44: #{tpu_custom_call.1} parent=1 // loop_footer
      %s104 = sadd.s32 1, %s100
    $region45: #{tpu_custom_call.1} parent=1 // loop_footer_branch
      %99 = sbr.rel target = $region41
    $region46: #{tpu_custom_call.1} parent=1 // loop_exit
      _
    loop: start=0, step=1, limit=8
    $region47: #{tpu_custom_call.1} parent=1 // loop_pre_header
      _
    $region48: #{tpu_custom_call.1} parent=1 // loop_header
      %s124 = sphi 0, %s128
      %p125 = scmp.ge.s32.totalorder %s124, 8
      %v129 = vphi 0.0, %v146
    $region49: #{tpu_custom_call.1} parent=1 // loop_header_branch
      %127 = sbr.rel (%p125) target = $region53
    $region50: #{tpu_custom_call.1} parent=1 // loop_body
      %s130 = sadd.s32 %s51, 0
      %s131 = sadd.s32 %s130, 3
      %s132 = sshra.s32 %s124, 7
      %s133 = sand.u32 %s124, 127
      %s134 = sadd.s32 %s132, %s131
      %s135 = smul.u32 %s134, 128
      %s136 = sshra.s32 %s124, 7
      %s137 = sand.u32 %s124, 127
      %s138 = sadd.s32 %s135, %s137
      %s139 = sld [smem:[#allocation4 + %s138]]
      %p140 = scmp.gt.s32.totalorder %s139, 0
      %s141 = scalar_select %p140, %s139, 0
      %p142 = scmp.lt.s32.totalorder %s141, 31
      %s143 = scalar_select %p142, %s141, 31
      %s144 = scalar_lea.vmem [#allocation5], %s143
      %v145 = vld [vmem:[%s144] sm:$0x1]
      %v146 = vadd.f32 %v129, %v145
    $region51: #{tpu_custom_call.1} parent=1 // loop_footer
      %s128 = sadd.s32 1, %s124
    $region52: #{tpu_custom_call.1} parent=1 // loop_footer_branch
      %123 = sbr.rel target = $region48
    $region53: #{tpu_custom_call.1} parent=1 // loop_exit
      _
    loop: start=0, step=1, limit=8
    $region54: #{tpu_custom_call.1} parent=1 // loop_pre_header
      _
    $region55: #{tpu_custom_call.1} parent=1 // loop_header
      %s148 = sphi 0, %s152
      %p149 = scmp.ge.s32.totalorder %s148, 8
      %v153 = vphi 0.0, %v170
    $region56: #{tpu_custom_call.1} parent=1 // loop_header_branch
      %151 = sbr.rel (%p149) target = $region60
    $region57: #{tpu_custom_call.1} parent=1 // loop_body
      %s154 = sadd.s32 %s51, 0
      %s155 = sadd.s32 %s154, 4
      %s156 = sshra.s32 %s148, 7
      %s157 = sand.u32 %s148, 127
      %s158 = sadd.s32 %s156, %s155
      %s159 = smul.u32 %s158, 128
      %s160 = sshra.s32 %s148, 7
      %s161 = sand.u32 %s148, 127
      %s162 = sadd.s32 %s159, %s161
      %s163 = sld [smem:[#allocation4 + %s162]]
      %p164 = scmp.gt.s32.totalorder %s163, 0
      %s165 = scalar_select %p164, %s163, 0
      %p166 = scmp.lt.s32.totalorder %s165, 31
      %s167 = scalar_select %p166, %s165, 31
      %s168 = scalar_lea.vmem [#allocation5], %s167
      %v169 = vld [vmem:[%s168] sm:$0x1]
      %v170 = vadd.f32 %v153, %v169
    $region58: #{tpu_custom_call.1} parent=1 // loop_footer
      %s152 = sadd.s32 1, %s148
    $region59: #{tpu_custom_call.1} parent=1 // loop_footer_branch
      %147 = sbr.rel target = $region55
    $region60: #{tpu_custom_call.1} parent=1 // loop_exit
      _
    loop: start=0, step=1, limit=8
    $region61: #{tpu_custom_call.1} parent=1 // loop_pre_header
      _
    $region62: #{tpu_custom_call.1} parent=1 // loop_header
      %s172 = sphi 0, %s176
      %p173 = scmp.ge.s32.totalorder %s172, 8
      %v177 = vphi 0.0, %v194
    $region63: #{tpu_custom_call.1} parent=1 // loop_header_branch
      %175 = sbr.rel (%p173) target = $region67
    $region64: #{tpu_custom_call.1} parent=1 // loop_body
      %s178 = sadd.s32 %s51, 0
      %s179 = sadd.s32 %s178, 5
      %s180 = sshra.s32 %s172, 7
      %s181 = sand.u32 %s172, 127
      %s182 = sadd.s32 %s180, %s179
      %s183 = smul.u32 %s182, 128
      %s184 = sshra.s32 %s172, 7
      %s185 = sand.u32 %s172, 127
      %s186 = sadd.s32 %s183, %s185
      %s187 = sld [smem:[#allocation4 + %s186]]
      %p188 = scmp.gt.s32.totalorder %s187, 0
      %s189 = scalar_select %p188, %s187, 0
      %p190 = scmp.lt.s32.totalorder %s189, 31
      %s191 = scalar_select %p190, %s189, 31
      %s192 = scalar_lea.vmem [#allocation5], %s191
      %v193 = vld [vmem:[%s192] sm:$0x1]
      %v194 = vadd.f32 %v177, %v193
    $region65: #{tpu_custom_call.1} parent=1 // loop_footer
      %s176 = sadd.s32 1, %s172
    $region66: #{tpu_custom_call.1} parent=1 // loop_footer_branch
      %171 = sbr.rel target = $region62
    $region67: #{tpu_custom_call.1} parent=1 // loop_exit
      _
    loop: start=0, step=1, limit=8
    $region68: #{tpu_custom_call.1} parent=1 // loop_pre_header
      _
    $region69: #{tpu_custom_call.1} parent=1 // loop_header
      %s196 = sphi 0, %s200
      %p197 = scmp.ge.s32.totalorder %s196, 8
      %v201 = vphi 0.0, %v218
    $region70: #{tpu_custom_call.1} parent=1 // loop_header_branch
      %199 = sbr.rel (%p197) target = $region74
    $region71: #{tpu_custom_call.1} parent=1 // loop_body
      %s202 = sadd.s32 %s51, 0
      %s203 = sadd.s32 %s202, 6
      %s204 = sshra.s32 %s196, 7
      %s205 = sand.u32 %s196, 127
      %s206 = sadd.s32 %s204, %s203
      %s207 = smul.u32 %s206, 128
      %s208 = sshra.s32 %s196, 7
      %s209 = sand.u32 %s196, 127
      %s210 = sadd.s32 %s207, %s209
      %s211 = sld [smem:[#allocation4 + %s210]]
      %p212 = scmp.gt.s32.totalorder %s211, 0
      %s213 = scalar_select %p212, %s211, 0
      %p214 = scmp.lt.s32.totalorder %s213, 31
      %s215 = scalar_select %p214, %s213, 31
      %s216 = scalar_lea.vmem [#allocation5], %s215
      %v217 = vld [vmem:[%s216] sm:$0x1]
      %v218 = vadd.f32 %v201, %v217
    $region72: #{tpu_custom_call.1} parent=1 // loop_footer
      %s200 = sadd.s32 1, %s196
    $region73: #{tpu_custom_call.1} parent=1 // loop_footer_branch
      %195 = sbr.rel target = $region69
    $region74: #{tpu_custom_call.1} parent=1 // loop_exit
      _
    loop: start=0, step=1, limit=8
    $region75: #{tpu_custom_call.1} parent=1 // loop_pre_header
      _
    $region76: #{tpu_custom_call.1} parent=1 // loop_header
      %s220 = sphi 0, %s224
      %p221 = scmp.ge.s32.totalorder %s220, 8
      %v225 = vphi 0.0, %v242
    $region77: #{tpu_custom_call.1} parent=1 // loop_header_branch
      %223 = sbr.rel (%p221) target = $region81
    $region78: #{tpu_custom_call.1} parent=1 // loop_body
      %s226 = sadd.s32 %s51, 0
      %s227 = sadd.s32 %s226, 7
      %s228 = sshra.s32 %s220, 7
      %s229 = sand.u32 %s220, 127
      %s230 = sadd.s32 %s228, %s227
      %s231 = smul.u32 %s230, 128
      %s232 = sshra.s32 %s220, 7
      %s233 = sand.u32 %s220, 127
      %s234 = sadd.s32 %s231, %s233
      %s235 = sld [smem:[#allocation4 + %s234]]
      %p236 = scmp.gt.s32.totalorder %s235, 0
      %s237 = scalar_select %p236, %s235, 0
      %p238 = scmp.lt.s32.totalorder %s237, 31
      %s239 = scalar_select %p238, %s237, 31
      %s240 = scalar_lea.vmem [#allocation5], %s239
      %v241 = vld [vmem:[%s240] sm:$0x1]
      %v242 = vadd.f32 %v225, %v241
    $region79: #{tpu_custom_call.1} parent=1 // loop_footer
      %s224 = sadd.s32 1, %s220
    $region80: #{tpu_custom_call.1} parent=1 // loop_footer_branch
      %219 = sbr.rel target = $region76
    $region81: #{tpu_custom_call.1} parent=1 // loop_exit
      _
    %v244 = vrot.slane %v81, 7
    %v247 = vrot.slane %v105, 6
    %v250 = vrot.slane %v129, 5
    %v253 = vrot.slane %v153, 4
    %v256 = vrot.slane %v177, 3
    %v259 = vrot.slane %v201, 2
    %v262 = vrot.slane %v225, 1
    %vm264 = vcmask 1040384
    %v265 = vsel %vm264, %v58, %v244
    %vm266 = vcmask 1041408
    %v267 = vsel %vm266, %v265, %v247
    %vm268 = vcmask 1042432
    %v269 = vsel %vm268, %v267, %v250
    %vm270 = vcmask 1043456
    %v271 = vsel %vm270, %v269, %v253
    %vm272 = vcmask 1044480
    %v273 = vsel %vm272, %v271, %v256
    %vm274 = vcmask 1045504
    %v275 = vsel %vm274, %v273, %v259
    %vm276 = vcmask 1046528
    %v277 = vsel %vm276, %v275, %v262
    %278 = vst [vmem:[#allocation2] sm:$0xff] %v277
    %v279 = vld [vmem:[#allocation2] sm:$0xff]
    %v280 = vld [vmem:[%s2] sm:$0x1]
    %v282 = vlaneseq
    %v283 = vshrl.u32 %v282, 7
    %v284 = vsub.s32 0, %v283
    %v285 = vrot.slane %v280, %v284
    %v287 = vadd.f32 %v279, %v285
    %v288 = vmax.f32 %v287, 0.0
    %v289 = vld [vmem:[#allocation8] sm:$0xff]
    %v290 = vld [vmem:[#allocation8 + $0x8] sm:$0xff]
    %v291 = vld [vmem:[#allocation8 + $0x10] sm:$0xff]
    %v292 = vld [vmem:[#allocation8 + $0x18] sm:$0xff]
    %v293 = vld [vmem:[#allocation8 + $0x20] sm:$0xff]
    %v294 = vld [vmem:[#allocation8 + $0x28] sm:$0xff]
    %v295 = vld [vmem:[#allocation8 + $0x30] sm:$0xff]
    %v296 = vld [vmem:[#allocation8 + $0x38] sm:$0xff]
    %v297 = vld [vmem:[#allocation8 + $0x40] sm:$0xff]
    %v298 = vld [vmem:[#allocation8 + $0x48] sm:$0xff]
    %v299 = vld [vmem:[#allocation8 + $0x50] sm:$0xff]
    %v300 = vld [vmem:[#allocation8 + $0x58] sm:$0xff]
    %v301 = vld [vmem:[#allocation8 + $0x60] sm:$0xff]
    %v302 = vld [vmem:[#allocation8 + $0x68] sm:$0xff]
    %v303 = vld [vmem:[#allocation8 + $0x70] sm:$0xff]
    %v304 = vld [vmem:[#allocation8 + $0x78] sm:$0xff]
    %v305 = vld [vmem:[%s4] sm:$0x1]
    %v307 = vlaneseq
    %v308 = vshrl.u32 %v307, 7
    %v309 = vsub.s32 0, %v308
    %v310 = vrot.slane %v305, %v309
    %312 = vmatprep.subr.mxu0 0.0
    %313 = vmatpush1.msra.mxu0 %v289
    %314 = vmatprep.subr.mxu0 0.0
    %315 = vmatpush1.msra.mxu0 %v290
    %316 = vmatprep.subr.mxu0 0.0
    %317 = vmatpush1.msra.mxu0 %v291
    %318 = vmatprep.subr.mxu0 0.0
    %319 = vmatpush1.msra.mxu0 %v292
    %320 = vmatprep.subr.mxu0 0.0
    %321 = vmatpush1.msra.mxu0 %v293
    %322 = vmatprep.subr.mxu0 0.0
    %323 = vmatpush1.msra.mxu0 %v294
    %324 = vmatprep.subr.mxu0 0.0
    %325 = vmatpush1.msra.mxu0 %v295
    %326 = vmatprep.subr.mxu0 0.0
    %327 = vmatpush1.msra.mxu0 %v296
    %328 = vmatprep.subr.mxu0 0.0
    %329 = vmatpush1.msra.mxu0 %v297
    %330 = vmatprep.subr.mxu0 0.0
    %331 = vmatpush1.msra.mxu0 %v298
    %332 = vmatprep.subr.mxu0 0.0
    %333 = vmatpush1.msra.mxu0 %v299
    %334 = vmatprep.subr.mxu0 0.0
    %335 = vmatpush1.msra.mxu0 %v300
    %336 = vmatprep.subr.mxu0 0.0
    %337 = vmatpush1.msra.mxu0 %v301
    %338 = vmatprep.subr.mxu0 0.0
    %339 = vmatpush1.msra.mxu0 %v302
    %340 = vmatprep.subr.mxu0 0.0
    %341 = vmatpush1.msra.mxu0 %v303
    %342 = vmatprep.subr.mxu0 0.0
    %343 = vmatpush1.msra.mxu0 %v304
    %344 = vmatprep.subr.mxu0 0.0
    %345 = vmatpush1.msra.mxu0 0.0
    %346 = vmatprep.subr.mxu0 0.0
    %347 = vmatpush1.msra.mxu0 0.0
    %348 = vmatprep.subr.mxu0 0.0
    %349 = vmatpush1.msra.mxu0 0.0
    %350 = vmatprep.subr.mxu0 0.0
    %351 = vmatpush1.msra.mxu0 0.0
    %352 = vmatprep.subr.mxu0 0.0
    %353 = vmatpush1.msra.mxu0 0.0
    %354 = vmatprep.subr.mxu0 0.0
    %355 = vmatpush1.msra.mxu0 0.0
    %356 = vmatprep.subr.mxu0 0.0
    %357 = vmatpush1.msra.mxu0 0.0
    %358 = vmatprep.subr.mxu0 0.0
    %359 = vmatpush1.msra.mxu0 0.0
    %360 = vmatprep.subr.mxu0 0.0
    %361 = vmatpush1.msra.mxu0 0.0
    %362 = vmatprep.subr.mxu0 0.0
    %363 = vmatpush1.msra.mxu0 0.0
    %364 = vmatprep.subr.mxu0 0.0
    %365 = vmatpush1.msra.mxu0 0.0
    %366 = vmatprep.subr.mxu0 0.0
    %367 = vmatpush1.msra.mxu0 0.0
    %368 = vmatprep.subr.mxu0 0.0
    %369 = vmatpush1.msra.mxu0 0.0
    %370 = vmatprep.subr.mxu0 0.0
    %371 = vmatpush1.msra.mxu0 0.0
    %372 = vmatprep.subr.mxu0 0.0
    %373 = vmatpush1.msra.mxu0 0.0
    %374 = vmatprep.subr.mxu0 0.0
    %375 = vmatpush1.msra.mxu0 0.0
    %376 = vmatprep.mubr.f32.mxu0 0.0
    %377 = vmatmul.mubr.f32.gmra.mrb[0].mxu0 %v288
    %v378 = vpop.f32.mrb[0].mxu0
    %v379 = vadd.f32 %v310, %v378
    %v380 = vpop.f32.mrb[0].mxu0
    %381 = vdwg.mxu0
    %382 = vst [vmem:[#allocation10] sm:$0xff] %v379
    // Predicated region
    $region82: #{tpu_custom_call.1} parent=1 // pred_check
      _
    $region83: #{tpu_custom_call.1} parent=1 // pred_check_branch
      %384 = sbr.rel (0) target = $region85
    $region84: #{tpu_custom_call.1} parent=1 // pred_region
      %s386 = ssub.s32 128, 128
      %387 = vsyncadd [#allocation7], %s386
      %s389 = sshll.u32 [#allocation10], 4
      %s390 = int_to_ptr.vmem [resolvable:$true] %s389
      %392 = dma.vmem_to_hbm [thread:$0]  %s390, 128, %s5, [#allocation7]
    $region85: #{tpu_custom_call.1} parent=1 // pred_fallthru
      _
    // Predicated region
    $region86: #{tpu_custom_call.1} parent=1 // pred_check
      _
    $region87: #{tpu_custom_call.1} parent=1 // pred_check_branch
      %394 = sbr.rel (0) target = $region89
    $region88: #{tpu_custom_call.1} parent=1 // pred_region
      %395 = dma.done [#allocation7], 128
    $region89: #{tpu_custom_call.1} parent=1 // pred_fallthru
      _
    %396 = vsyncpa [#allocation6], 1
    %397 = vsyncpa [#allocation9], 1
    %398 = vsyncpa [#allocation7], 1

// kernel: tpu_custom_call.1
$region0: #{tpu_custom_call.1}
  #allocation0 [shape = 'u32[]', space=smem, size = 0x4, offset = 0x4, fixed_abs, tag = 'smem constant byte address 0x4 - core index']
  #allocation1 [shape = 'u32[144,128]{1,0:T(1,128)}', space=vmem, size = 0x12000, scoped, tag = 'internal scratch']
  #allocation2 [shape = 'f32[8,128]{1,0:T(8,128)}', space=vmem, size = 0x1000, scoped, tag = 'scratch operand']
  #allocation3 [shape = 's32[1]{0}', space=sflag, size = 0x4, scoped, tag = 'scoped memory for tpu_custom_call.1']
  #allocation4 [shape = 'u8[4096]{0}', space=smem, size = 0x1000, scoped, tag = 'prefetched SMEM operand 0']
  %s0 = inlined_call_operand.hbm [shape: s32[8,8], index: 0, kind: input, shape index: {}]
  %s1 = inlined_call_operand.hbm [shape: f32[32,128], index: 1, kind: input, shape index: {}]
  %s2 = inlined_call_operand.vmem [shape: f32[1,128], index: 2, kind: input, shape index: {}]
  %s3 = inlined_call_operand.hbm [shape: f32[128,128], index: 3, kind: input, shape index: {}]
  %s4 = inlined_call_operand.vmem [shape: f32[1,128], index: 4, kind: input, shape index: {}]
  %s5 = inlined_call_operand.hbm [shape: f32[8,128], index: 5, kind: output, shape index: {}]
  %s6 = sld [smem:[#allocation0]]
  $region90: #{tpu_custom_call.1} parent=0
    _
  %s8 = ssub.s32 1, %s6
  %s9 = scalar_select 0, %s8, %s6
  %11 = dma.hbm_to_smem %s0, 128, [#allocation4], [#allocation3]
  %12 = dma.done [#allocation3], 128
  %13 = sfence
  $region1: #{tpu_custom_call.1} parent=0
    #allocation5 [shape = 'u8[16384]{0}', space=vmem, size = 0x4000, scoped, tag = 'input window, operand 1, single buffered']
    #allocation6 [shape = 's32[1]{0}', space=sflag, size = 0x4, scoped, tag = 'scoped memory for tpu_custom_call.1']
    #allocation7 [shape = 's32[1]{0}', space=sflag, size = 0x4, scoped, tag = 'scoped memory for tpu_custom_call.1']
    #allocation8 [shape = 'u8[65536]{0}', space=vmem, size = 0x10000, scoped, tag = 'input window, operand 3, single buffered']
    #allocation9 [shape = 's32[1]{0}', space=sflag, size = 0x4, scoped, tag = 'scoped memory for tpu_custom_call.1']
    #allocation10 [shape = 'u8[4096]{0}', space=vmem, size = 0x1000, scoped, tag = 'output window, operand 0, single buffered']
    %14 = vsyncpa [#allocation6], 0
    %15 = vsyncpa [#allocation9], 0
    %16 = vsyncpa [#allocation7], 0
    // Predicated region
    $region2: #{tpu_custom_call.1} parent=1 // pred_check
      _
    $region3: #{tpu_custom_call.1} parent=1 // pred_check_branch
      %18 = sbr.rel (0) target = $region5
    $region4: #{tpu_custom_call.1} parent=1 // pred_region
      %s20 = ssub.s32 512, 512
      %21 = vsyncadd [#allocation6], %s20
      %s22 = sshll.u32 [#allocation5], 4
      %s23 = int_to_ptr.vmem [resolvable:$true] %s22
      %28 = dma.hbm_to_vmem [thread:$0]  %s1, 512, %s23, [#allocation6], 128, 128, 8
    $region5: #{tpu_custom_call.1} parent=1 // pred_fallthru
      _
    // Predicated region
    $region6: #{tpu_custom_call.1} parent=1 // pred_check
      _
    $region7: #{tpu_custom_call.1} parent=1 // pred_check_branch
      %30 = sbr.rel (0) target = $region9
    $region8: #{tpu_custom_call.1} parent=1 // pred_region
      _
    $region9: #{tpu_custom_call.1} parent=1 // pred_fallthru
      _
    // Predicated region
    $region10: #{tpu_custom_call.1} parent=1 // pred_check
      _
    $region11: #{tpu_custom_call.1} parent=1 // pred_check_branch
      %32 = sbr.rel (0) target = $region13
    $region12: #{tpu_custom_call.1} parent=1 // pred_region
      %s34 = ssub.s32 2048, 2048
      %35 = vsyncadd [#allocation9], %s34
      %s36 = sshll.u32 [#allocation8], 4
      %s37 = int_to_ptr.vmem [resolvable:$true] %s36
      %42 = dma.hbm_to_vmem [thread:$0]  %s3, 2048, %s37, [#allocation9], 128, 128, 8
    $region13: #{tpu_custom_call.1} parent=1 // pred_fallthru
      _
    // Predicated region
    $region14: #{tpu_custom_call.1} parent=1 // pred_check
      _
    $region15: #{tpu_custom_call.1} parent=1 // pred_check_branch
      %44 = sbr.rel (0) target = $region17
    $region16: #{tpu_custom_call.1} parent=1 // pred_region
      _
    $region17: #{tpu_custom_call.1} parent=1 // pred_fallthru
      _
    // Predicated region
    $region18: #{tpu_custom_call.1} parent=1 // pred_check
      _
    $region19: #{tpu_custom_call.1} parent=1 // pred_check_branch
      %46 = sbr.rel (0) target = $region21
    $region20: #{tpu_custom_call.1} parent=1 // pred_region
      %47 = dma.done [#allocation6], 512
    $region21: #{tpu_custom_call.1} parent=1 // pred_fallthru
      _
    // Predicated region
    $region22: #{tpu_custom_call.1} parent=1 // pred_check
      _
    $region23: #{tpu_custom_call.1} parent=1 // pred_check_branch
      %49 = sbr.rel (0) target = $region25
    $region24: #{tpu_custom_call.1} parent=1 // pred_region
      %50 = dma.done [#allocation9], 2048
    $region25: #{tpu_custom_call.1} parent=1 // pred_fallthru
      _
    %s51 = smul.u32 0, 8
    loop: start=0, step=1, limit=8
    $region26: #{tpu_custom_call.1} parent=1 // loop_pre_header
      _
    $region27: #{tpu_custom_call.1} parent=1 // loop_header
      %s53 = sphi 0, %s57
      %p54 = scmp.ge.s32.totalorder %s53, 8
      %v58 = vphi 0.0, %v74
    $region28: #{tpu_custom_call.1} parent=1 // loop_header_branch
      %56 = sbr.rel (%p54) target = $region32
    $region29: #{tpu_custom_call.1} parent=1 // loop_body
      %s59 = sadd.s32 %s51, 0
      %s60 = sshra.s32 %s53, 7
      %s61 = sand.u32 %s53, 127
      %s62 = sadd.s32 %s60, %s59
      %s63 = smul.u32 %s62, 128
      %s64 = sshra.s32 %s53, 7
      %s65 = sand.u32 %s53, 127
      %s66 = sadd.s32 %s63, %s65
      %s67 = sld [smem:[#allocation4 + %s66]]
      %p68 = scmp.gt.s32.totalorder %s67, 0
      %s69 = scalar_select %p68, %s67, 0
      %p70 = scmp.lt.s32.totalorder %s69, 31
      %s71 = scalar_select %p70, %s69, 31
      %s72 = scalar_lea.vmem [#allocation5], %s71
      %v73 = vld [vmem:[%s72] sm:$0x1]
      %v74 = vadd.f32 %v58, %v73
    $region30: #{tpu_custom_call.1} parent=1 // loop_footer
      %s57 = sadd.s32 1, %s53
    $region31: #{tpu_custom_call.1} parent=1 // loop_footer_branch
      %52 = sbr.rel target = $region27
    $region32: #{tpu_custom_call.1} parent=1 // loop_exit
      _
    loop: start=0, step=1, limit=8
    $region33: #{tpu_custom_call.1} parent=1 // loop_pre_header
      _
    $region34: #{tpu_custom_call.1} parent=1 // loop_header
      %s76 = sphi 0, %s80
      %p77 = scmp.ge.s32.totalorder %s76, 8
      %v81 = vphi 0.0, %v98
    $region35: #{tpu_custom_call.1} parent=1 // loop_header_branch
      %79 = sbr.rel (%p77) target = $region39
    $region36: #{tpu_custom_call.1} parent=1 // loop_body
      %s82 = sadd.s32 %s51, 0
      %s83 = sadd.s32 %s82, 1
      %s84 = sshra.s32 %s76, 7
      %s85 = sand.u32 %s76, 127
      %s86 = sadd.s32 %s84, %s83
      %s87 = smul.u32 %s86, 128
      %s88 = sshra.s32 %s76, 7
      %s89 = sand.u32 %s76, 127
      %s90 = sadd.s32 %s87, %s89
      %s91 = sld [smem:[#allocation4 + %s90]]
      %p92 = scmp.gt.s32.totalorder %s91, 0
      %s93 = scalar_select %p92, %s91, 0
      %p94 = scmp.lt.s32.totalorder %s93, 31
      %s95 = scalar_select %p94, %s93, 31
      %s96 = scalar_lea.vmem [#allocation5], %s95
      %v97 = vld [vmem:[%s96] sm:$0x1]
      %v98 = vadd.f32 %v81, %v97
    $region37: #{tpu_custom_call.1} parent=1 // loop_footer
      %s80 = sadd.s32 1, %s76
    $region38: #{tpu_custom_call.1} parent=1 // loop_footer_branch
      %75 = sbr.rel target = $region34
    $region39: #{tpu_custom_call.1} parent=1 // loop_exit
      _
    loop: start=0, step=1, limit=8
    $region40: #{tpu_custom_call.1} parent=1 // loop_pre_header
      _
    $region41: #{tpu_custom_call.1} parent=1 // loop_header
      %s100 = sphi 0, %s104
      %p101 = scmp.ge.s32.totalorder %s100, 8
      %v105 = vphi 0.0, %v122
    $region42: #{tpu_custom_call.1} parent=1 // loop_header_branch
      %103 = sbr.rel (%p101) target = $region46
    $region43: #{tpu_custom_call.1} parent=1 // loop_body
      %s106 = sadd.s32 %s51, 0
      %s107 = sadd.s32 %s106, 2
      %s108 = sshra.s32 %s100, 7
      %s109 = sand.u32 %s100, 127
      %s110 = sadd.s32 %s108, %s107
      %s111 = smul.u32 %s110, 128
      %s112 = sshra.s32 %s100, 7
      %s113 = sand.u32 %s100, 127
      %s114 = sadd.s32 %s111, %s113
      %s115 = sld [smem:[#allocation4 + %s114]]
      %p116 = scmp.gt.s32.totalorder %s115, 0
      %s117 = scalar_select %p116, %s115, 0
      %p118 = scmp.lt.s32.totalorder %s117, 31
      %s119 = scalar_select %p118, %s117, 31
      %s120 = scalar_lea.vmem [#allocation5], %s119
      %v121 = vld [vmem:[%s120] sm:$0x1]
      %v122 = vadd.f32 %v105, %v121
    $region44: #{tpu_custom_call.1} parent=1 // loop_footer
      %s104 = sadd.s32 1, %s100
    $region45: #{tpu_custom_call.1} parent=1 // loop_footer_branch
      %99 = sbr.rel target = $region41
    $region46: #{tpu_custom_call.1} parent=1 // loop_exit
      _
    loop: start=0, step=1, limit=8
    $region47: #{tpu_custom_call.1} parent=1 // loop_pre_header
      _
    $region48: #{tpu_custom_call.1} parent=1 // loop_header
      %s124 = sphi 0, %s128
      %p125 = scmp.ge.s32.totalorder %s124, 8
      %v129 = vphi 0.0, %v146
    $region49: #{tpu_custom_call.1} parent=1 // loop_header_branch
      %127 = sbr.rel (%p125) target = $region53
    $region50: #{tpu_custom_call.1} parent=1 // loop_body
      %s130 = sadd.s32 %s51, 0
      %s131 = sadd.s32 %s130, 3
      %s132 = sshra.s32 %s124, 7
      %s133 = sand.u32 %s124, 127
      %s134 = sadd.s32 %s132, %s131
      %s135 = smul.u32 %s134, 128
      %s136 = sshra.s32 %s124, 7
      %s137 = sand.u32 %s124, 127
      %s138 = sadd.s32 %s135, %s137
      %s139 = sld [smem:[#allocation4 + %s138]]
      %p140 = scmp.gt.s32.totalorder %s139, 0
      %s141 = scalar_select %p140, %s139, 0
      %p142 = scmp.lt.s32.totalorder %s141, 31
      %s143 = scalar_select %p142, %s141, 31
      %s144 = scalar_lea.vmem [#allocation5], %s143
      %v145 = vld [vmem:[%s144] sm:$0x1]
      %v146 = vadd.f32 %v129, %v145
    $region51: #{tpu_custom_call.1} parent=1 // loop_footer
      %s128 = sadd.s32 1, %s124
    $region52: #{tpu_custom_call.1} parent=1 // loop_footer_branch
      %123 = sbr.rel target = $region48
    $region53: #{tpu_custom_call.1} parent=1 // loop_exit
      _
    loop: start=0, step=1, limit=8
    $region54: #{tpu_custom_call.1} parent=1 // loop_pre_header
      _
    $region55: #{tpu_custom_call.1} parent=1 // loop_header
      %s148 = sphi 0, %s152
      %p149 = scmp.ge.s32.totalorder %s148, 8
      %v153 = vphi 0.0, %v170
    $region56: #{tpu_custom_call.1} parent=1 // loop_header_branch
      %151 = sbr.rel (%p149) target = $region60
    $region57: #{tpu_custom_call.1} parent=1 // loop_body
      %s154 = sadd.s32 %s51, 0
      %s155 = sadd.s32 %s154, 4
      %s156 = sshra.s32 %s148, 7
      %s157 = sand.u32 %s148, 127
      %s158 = sadd.s32 %s156, %s155
      %s159 = smul.u32 %s158, 128
      %s160 = sshra.s32 %s148, 7
      %s161 = sand.u32 %s148, 127
      %s162 = sadd.s32 %s159, %s161
      %s163 = sld [smem:[#allocation4 + %s162]]
      %p164 = scmp.gt.s32.totalorder %s163, 0
      %s165 = scalar_select %p164, %s163, 0
      %p166 = scmp.lt.s32.totalorder %s165, 31
      %s167 = scalar_select %p166, %s165, 31
      %s168 = scalar_lea.vmem [#allocation5], %s167
      %v169 = vld [vmem:[%s168] sm:$0x1]
      %v170 = vadd.f32 %v153, %v169
    $region58: #{tpu_custom_call.1} parent=1 // loop_footer
      %s152 = sadd.s32 1, %s148
    $region59: #{tpu_custom_call.1} parent=1 // loop_footer_branch
      %147 = sbr.rel target = $region55
    $region60: #{tpu_custom_call.1} parent=1 // loop_exit
      _
    loop: start=0, step=1, limit=8
    $region61: #{tpu_custom_call.1} parent=1 // loop_pre_header
      _
    $region62: #{tpu_custom_call.1} parent=1 // loop_header
      %s172 = sphi 0, %s176
      %p173 = scmp.ge.s32.totalorder %s172, 8
      %v177 = vphi 0.0, %v194
    $region63: #{tpu_custom_call.1} parent=1 // loop_header_branch
      %175 = sbr.rel (%p173) target = $region67
    $region64: #{tpu_custom_call.1} parent=1 // loop_body
      %s178 = sadd.s32 %s51, 0
      %s179 = sadd.s32 %s178, 5
      %s180 = sshra.s32 %s172, 7
      %s181 = sand.u32 %s172, 127
      %s182 = sadd.s32 %s180, %s179
      %s183 = smul.u32 %s182, 128
      %s184 = sshra.s32 %s172, 7
      %s185 = sand.u32 %s172, 127
      %s186 = sadd.s32 %s183, %s185
      %s187 = sld [smem:[#allocation4 + %s186]]
      %p188 = scmp.gt.s32.totalorder %s187, 0
      %s189 = scalar_select %p188, %s187, 0
      %p190 = scmp.lt.s32.totalorder %s189, 31
      %s191 = scalar_select %p190, %s189, 31
      %s192 = scalar_lea.vmem [#allocation5], %s191
      %v193 = vld [vmem:[%s192] sm:$0x1]
      %v194 = vadd.f32 %v177, %v193
    $region65: #{tpu_custom_call.1} parent=1 // loop_footer
      %s176 = sadd.s32 1, %s172
    $region66: #{tpu_custom_call.1} parent=1 // loop_footer_branch
      %171 = sbr.rel target = $region62
    $region67: #{tpu_custom_call.1} parent=1 // loop_exit
      _
    loop: start=0, step=1, limit=8
    $region68: #{tpu_custom_call.1} parent=1 // loop_pre_header
      _
    $region69: #{tpu_custom_call.1} parent=1 // loop_header
      %s196 = sphi 0, %s200
      %p197 = scmp.ge.s32.totalorder %s196, 8
      %v201 = vphi 0.0, %v218
    $region70: #{tpu_custom_call.1} parent=1 // loop_header_branch
      %199 = sbr.rel (%p197) target = $region74
    $region71: #{tpu_custom_call.1} parent=1 // loop_body
      %s202 = sadd.s32 %s51, 0
      %s203 = sadd.s32 %s202, 6
      %s204 = sshra.s32 %s196, 7
      %s205 = sand.u32 %s196, 127
      %s206 = sadd.s32 %s204, %s203
      %s207 = smul.u32 %s206, 128
      %s208 = sshra.s32 %s196, 7
      %s209 = sand.u32 %s196, 127
      %s210 = sadd.s32 %s207, %s209
      %s211 = sld [smem:[#allocation4 + %s210]]
      %p212 = scmp.gt.s32.totalorder %s211, 0
      %s213 = scalar_select %p212, %s211, 0
      %p214 = scmp.lt.s32.totalorder %s213, 31
      %s215 = scalar_select %p214, %s213, 31
      %s216 = scalar_lea.vmem [#allocation5], %s215
      %v217 = vld [vmem:[%s216] sm:$0x1]
      %v218 = vadd.f32 %v201, %v217
    $region72: #{tpu_custom_call.1} parent=1 // loop_footer
      %s200 = sadd.s32 1, %s196
    $region73: #{tpu_custom_call.1} parent=1 // loop_footer_branch
      %195 = sbr.rel target = $region69
    $region74: #{tpu_custom_call.1} parent=1 // loop_exit
      _
    loop: start=0, step=1, limit=8
    $region75: #{tpu_custom_call.1} parent=1 // loop_pre_header
      _
    $region76: #{tpu_custom_call.1} parent=1 // loop_header
      %s220 = sphi 0, %s224
      %p221 = scmp.ge.s32.totalorder %s220, 8
      %v225 = vphi 0.0, %v242
    $region77: #{tpu_custom_call.1} parent=1 // loop_header_branch
      %223 = sbr.rel (%p221) target = $region81
    $region78: #{tpu_custom_call.1} parent=1 // loop_body
      %s226 = sadd.s32 %s51, 0
      %s227 = sadd.s32 %s226, 7
      %s228 = sshra.s32 %s220, 7
      %s229 = sand.u32 %s220, 127
      %s230 = sadd.s32 %s228, %s227
      %s231 = smul.u32 %s230, 128
      %s232 = sshra.s32 %s220, 7
      %s233 = sand.u32 %s220, 127
      %s234 = sadd.s32 %s231, %s233
      %s235 = sld [smem:[#allocation4 + %s234]]
      %p236 = scmp.gt.s32.totalorder %s235, 0
      %s237 = scalar_select %p236, %s235, 0
      %p238 = scmp.lt.s32.totalorder %s237, 31
      %s239 = scalar_select %p238, %s237, 31
      %s240 = scalar_lea.vmem [#allocation5], %s239
      %v241 = vld [vmem:[%s240] sm:$0x1]
      %v242 = vadd.f32 %v225, %v241
    $region79: #{tpu_custom_call.1} parent=1 // loop_footer
      %s224 = sadd.s32 1, %s220
    $region80: #{tpu_custom_call.1} parent=1 // loop_footer_branch
      %219 = sbr.rel target = $region76
    $region81: #{tpu_custom_call.1} parent=1 // loop_exit
      _
    %v244 = vrot.slane %v81, 7
    %v247 = vrot.slane %v105, 6
    %v250 = vrot.slane %v129, 5
    %v253 = vrot.slane %v153, 4
    %v256 = vrot.slane %v177, 3
    %v259 = vrot.slane %v201, 2
    %v262 = vrot.slane %v225, 1
    %vm264 = vcmask 1040384
    %v265 = vsel %vm264, %v58, %v244
    %vm266 = vcmask 1041408
    %v267 = vsel %vm266, %v265, %v247
    %vm268 = vcmask 1042432
    %v269 = vsel %vm268, %v267, %v250
    %vm270 = vcmask 1043456
    %v271 = vsel %vm270, %v269, %v253
    %vm272 = vcmask 1044480
    %v273 = vsel %vm272, %v271, %v256
    %vm274 = vcmask 1045504
    %v275 = vsel %vm274, %v273, %v259
    %vm276 = vcmask 1046528
    %v277 = vsel %vm276, %v275, %v262
    %278 = vst [vmem:[#allocation2] sm:$0xff] %v277
    %v279 = vld [vmem:[#allocation2] sm:$0xff]
    %v280 = vld [vmem:[%s2] sm:$0x1]
    %v282 = vlaneseq
    %v283 = vshrl.u32 %v282, 7
    %v284 = vsub.s32 0, %v283
    %v285 = vrot.slane %v280, %v284
    %v287 = vadd.f32 %v279, %v285
    %v288 = vmax.f32 %v287, 0.0
    %v289 = vld [vmem:[#allocation8] sm:$0xff]
    %v290 = vld [vmem:[#allocation8 + $0x8] sm:$0xff]
    %v291 = vld [vmem:[#allocation8 + $0x10] sm:$0xff]
    %v292 = vld [vmem:[#allocation8 + $0x18] sm:$0xff]
    %v293 = vld [vmem:[#allocation8 + $0x20] sm:$0xff]
    %v294 = vld [vmem:[#allocation8 + $0x28] sm:$0xff]
    %v295 = vld [vmem:[#allocation8 + $0x30] sm:$0xff]
    %v296 = vld [vmem:[#allocation8 + $0x38] sm:$0xff]
    %v297 = vld [vmem:[#allocation8 + $0x40] sm:$0xff]
    %v298 = vld [vmem:[#allocation8 + $0x48] sm:$0xff]
    %v299 = vld [vmem:[#allocation8 + $0x50] sm:$0xff]
    %v300 = vld [vmem:[#allocation8 + $0x58] sm:$0xff]
    %v301 = vld [vmem:[#allocation8 + $0x60] sm:$0xff]
    %v302 = vld [vmem:[#allocation8 + $0x68] sm:$0xff]
    %v303 = vld [vmem:[#allocation8 + $0x70] sm:$0xff]
    %v304 = vld [vmem:[#allocation8 + $0x78] sm:$0xff]
    %v305 = vld [vmem:[%s4] sm:$0x1]
    %v307 = vlaneseq
    %v308 = vshrl.u32 %v307, 7
    %v309 = vsub.s32 0, %v308
    %v310 = vrot.slane %v305, %v309
    %312 = vmatprep.subr.mxu0 0.0
    %313 = vmatpush1.msra.mxu0 %v289
    %314 = vmatprep.subr.mxu0 0.0
    %315 = vmatpush1.msra.mxu0 %v290
    %316 = vmatprep.subr.mxu0 0.0
    %317 = vmatpush1.msra.mxu0 %v291
    %318 = vmatprep.subr.mxu0 0.0
    %319 = vmatpush1.msra.mxu0 %v292
    %320 = vmatprep.subr.mxu0 0.0
    %321 = vmatpush1.msra.mxu0 %v293
    %322 = vmatprep.subr.mxu0 0.0
    %323 = vmatpush1.msra.mxu0 %v294
    %324 = vmatprep.subr.mxu0 0.0
    %325 = vmatpush1.msra.mxu0 %v295
    %326 = vmatprep.subr.mxu0 0.0
    %327 = vmatpush1.msra.mxu0 %v296
    %328 = vmatprep.subr.mxu0 0.0
    %329 = vmatpush1.msra.mxu0 %v297
    %330 = vmatprep.subr.mxu0 0.0
    %331 = vmatpush1.msra.mxu0 %v298
    %332 = vmatprep.subr.mxu0 0.0
    %333 = vmatpush1.msra.mxu0 %v299
    %334 = vmatprep.subr.mxu0 0.0
    %335 = vmatpush1.msra.mxu0 %v300
    %336 = vmatprep.subr.mxu0 0.0
    %337 = vmatpush1.msra.mxu0 %v301
    %338 = vmatprep.subr.mxu0 0.0
    %339 = vmatpush1.msra.mxu0 %v302
    %340 = vmatprep.subr.mxu0 0.0
    %341 = vmatpush1.msra.mxu0 %v303
    %342 = vmatprep.subr.mxu0 0.0
    %343 = vmatpush1.msra.mxu0 %v304
    %344 = vmatprep.subr.mxu0 0.0
    %345 = vmatpush1.msra.mxu0 0.0
    %346 = vmatprep.subr.mxu0 0.0
    %347 = vmatpush1.msra.mxu0 0.0
    %348 = vmatprep.subr.mxu0 0.0
    %349 = vmatpush1.msra.mxu0 0.0
    %350 = vmatprep.subr.mxu0 0.0
    %351 = vmatpush1.msra.mxu0 0.0
    %352 = vmatprep.subr.mxu0 0.0
    %353 = vmatpush1.msra.mxu0 0.0
    %354 = vmatprep.subr.mxu0 0.0
    %355 = vmatpush1.msra.mxu0 0.0
    %356 = vmatprep.subr.mxu0 0.0
    %357 = vmatpush1.msra.mxu0 0.0
    %358 = vmatprep.subr.mxu0 0.0
    %359 = vmatpush1.msra.mxu0 0.0
    %360 = vmatprep.subr.mxu0 0.0
    %361 = vmatpush1.msra.mxu0 0.0
    %362 = vmatprep.subr.mxu0 0.0
    %363 = vmatpush1.msra.mxu0 0.0
    %364 = vmatprep.subr.mxu0 0.0
    %365 = vmatpush1.msra.mxu0 0.0
    %366 = vmatprep.subr.mxu0 0.0
    %367 = vmatpush1.msra.mxu0 0.0
    %368 = vmatprep.subr.mxu0 0.0
    %369 = vmatpush1.msra.mxu0 0.0
    %370 = vmatprep.subr.mxu0 0.0
    %371 = vmatpush1.msra.mxu0 0.0
    %372 = vmatprep.subr.mxu0 0.0
    %373 = vmatpush1.msra.mxu0 0.0
    %374 = vmatprep.subr.mxu0 0.0
    %375 = vmatpush1.msra.mxu0 0.0
    %376 = vmatprep.mubr.f32.mxu0 0.0
    %377 = vmatmul.mubr.f32.gmra.mrb[0].mxu0 %v288
    %v378 = vpop.f32.mrb[0].mxu0
    %v379 = vadd.f32 %v310, %v378
    %v380 = vpop.f32.mrb[0].mxu0
    %381 = vdwg.mxu0
    %382 = vst [vmem:[#allocation10] sm:$0xff] %v379
    // Predicated region
    $region82: #{tpu_custom_call.1} parent=1 // pred_check
      _
    $region83: #{tpu_custom_call.1} parent=1 // pred_check_branch
      %384 = sbr.rel (0) target = $region85
    $region84: #{tpu_custom_call.1} parent=1 // pred_region
      %s386 = ssub.s32 128, 128
      %387 = vsyncadd [#allocation7], %s386
      %s389 = sshll.u32 [#allocation10], 4
      %s390 = int_to_ptr.vmem [resolvable:$true] %s389
      %392 = dma.vmem_to_hbm [thread:$0]  %s390, 128, %s5, [#allocation7]
    $region85: #{tpu_custom_call.1} parent=1 // pred_fallthru
      _
    // Predicated region
    $region86: #{tpu_custom_call.1} parent=1 // pred_check
      _
    $region87: #{tpu_custom_call.1} parent=1 // pred_check_branch
      %394 = sbr.rel (0) target = $region89
    $region88: #{tpu_custom_call.1} parent=1 // pred_region
      %395 = dma.done [#allocation7], 128
    $region89: #{tpu_custom_call.1} parent=1 // pred_fallthru
      _
    %396 = vsyncpa [#allocation6], 1
    %397 = vsyncpa [#allocation9], 1
    %398 = vsyncpa [#allocation7], 1

</llo_original>
